<compile_context>
chip_gen: v7x
topology: tpu7x:2x2x1
jax: 0.10.0
libtpu: 0.0.40
codegen_flags: <defaults>
</compile_context>

<pallas_src>
import functools

import jax
import jax.numpy as jnp
from jax.experimental import pallas as pl
from jax.experimental.pallas import tpu as pltpu


# ----------------------------------------------------------------------------
# Pallas kernel 1: FuzzyUI forward for one row tile, fused weight multiply.
#   x        : [TM, D] user_neigh embedding tile
#   centers  : [R, D]  gaussian centers
#   inv      : [R, D]  -1 / (2 * scales^2)  (divide hoisted out of the kernel loop)
#   params   : [7, R]  rows = kan_w, kan_b, bn1_g, bn1_b, bn2_g, bn2_b, defuzz_w
#   scalars  : [1, 2]  SMEM = [defuzz_bias, output_scale (2.75)]
#   out      : [TM, D] x * sigmoid(defuzz(BN(BN(KAN(membership))))) * scale
# ----------------------------------------------------------------------------
def _fuzzy_weighted_kernel(n_total, tm, x_ref, centers_ref, inv_ref,
                           params_ref, scalars_ref, o_ref):
    x = x_ref[...].astype(jnp.float32)                       # [TM, D]
    d = x.shape[1]
    num_rules = centers_ref.shape[0]
    eps = 1e-5

    # rows valid in this tile (last tile of a non-multiple N is partial);
    # padded/garbage rows are masked out of the BatchNorm statistics so the
    # per-chunk (<=512 row) BN semantics of the torch module are preserved.
    valid = jnp.minimum(tm, n_total - pl.program_id(0) * tm)
    row_idx = jax.lax.broadcasted_iota(jnp.int32, (tm, 1), 0)
    row_mask = row_idx < valid                               # [TM, 1]
    cnt = valid.astype(jnp.float32)

    # gaussian membership averaged over the feature dim (== torch sum / dim).
    cols = []
    for r in range(num_rules):                               # static, small R
        diff = x - centers_ref[r:r + 1, :].astype(jnp.float32)
        memb_r = jnp.sum(
            jnp.exp(diff * diff * inv_ref[r:r + 1, :].astype(jnp.float32)),
            axis=1, keepdims=True) / d                       # [TM, 1]
        cols.append(memb_r)
    memb = jnp.concatenate(cols, axis=1)                     # [TM, R]

    kan_w = params_ref[0:1, :]
    kan_b = params_ref[1:2, :]
    bn1_g = params_ref[2:3, :]
    bn1_b = params_ref[3:4, :]
    bn2_g = params_ref[4:5, :]
    bn2_b = params_ref[5:6, :]
    dfz_w = params_ref[6:7, :]

    # TODO(synk): KANLinear(1,1) is undefined in the source file; modeled as a
    #             deterministic per-rule 1->1 affine map.
    f = memb * kan_w + kan_b                                 # [TM, R]

    def batch_norm(v, g, b):                                 # training-mode BN
        vm = jnp.where(row_mask, v, 0.0)
        mu = jnp.sum(vm, axis=0, keepdims=True) / cnt        # [1, R]
        c = jnp.where(row_mask, v - mu, 0.0)
        var = jnp.sum(c * c, axis=0, keepdims=True) / cnt
        return (v - mu) * jax.lax.rsqrt(var + eps) * g + b

    y = batch_norm(f, bn1_g, bn1_b)                          # self.batch_norm
    y = batch_norm(y, bn2_g, bn2_b)                          # defuzzifier BN
    logits = jnp.sum(y * dfz_w, axis=1, keepdims=True) + scalars_ref[0, 0]
    sim = jax.nn.sigmoid(logits) * scalars_ref[0, 1]         # * self.scale

    # fused "user_neigh_emb * fuzzy_weights" -> lane-dense [TM, D] store
    o_ref[...] = (x * sim).astype(o_ref.dtype)


def fuzzy_weighted_forward(neigh_emb, layer_p, batch_size=512):
    """neigh_emb [N, D] -> neigh_emb * FuzzyUI(neigh_emb), shape [N, D]."""
    n, d = neigh_emb.shape
    r = layer_p["centers"].shape[0]
    tm = min(batch_size, n)
    # hoisted out of the EUP-bound loop: exp coefficient -1 / (2 s^2)
    inv = -1.0 / (2.0 * layer_p["scales"] * layer_p["scales"])
    # NOTE: torch slices scales[:chunk_size]; that is a no-op whenever the
    #       chunk is >= num_rules (the only case where torch broadcasting is
    #       valid), so full scales are used here.
    kernel = functools.partial(_fuzzy_weighted_kernel, n, tm)
    return pl.pallas_call(
        kernel,
        grid=(pl.cdiv(n, tm),),
        in_specs=[
            pl.BlockSpec((tm, d), lambda i: (i, 0)),              # x tiles (pipelined)
            pl.BlockSpec((r, d), lambda i: (0, 0)),               # centers (invariant)
            pl.BlockSpec((r, d), lambda i: (0, 0)),               # -1/(2 s^2)
            pl.BlockSpec((7, r), lambda i: (0, 0)),               # per-rule params
            pl.BlockSpec(memory_space=pltpu.MemorySpace.SMEM),    # scalars
        ],
        out_specs=pl.BlockSpec((tm, d), lambda i: (i, 0)),
        out_shape=jax.ShapeDtypeStruct((n, d), neigh_emb.dtype),
        compiler_params=pltpu.CompilerParams(
            dimension_semantics=("parallel",)),                   # v7x megacore
    )(neigh_emb, layer_p["centers"], inv, layer_p["params"], layer_p["scalars"])


# ----------------------------------------------------------------------------
# Pallas kernel 2: fused row-wise L2 normalize (F.normalize) + residual add.
# ----------------------------------------------------------------------------
def _norm_residual_kernel(emb_ref, res_ref, norm_out_ref, res_out_ref):
    x = emb_ref[...].astype(jnp.float32)
    norm = jnp.sqrt(jnp.sum(x * x, axis=1, keepdims=True))
    y = x / jnp.maximum(norm, 1e-12)                          # F.normalize semantics
    norm_out_ref[...] = y.astype(norm_out_ref.dtype)
    res_out_ref[...] = (res_ref[...].astype(jnp.float32) + y).astype(res_out_ref.dtype)


def normalize_and_residual(emb, res_emb, tile_rows=2048):
    """returns (F.normalize(emb), res_emb + F.normalize(emb)) in one HBM pass."""
    rows, d = emb.shape
    tm = min(tile_rows, rows)
    norm_emb, new_res = pl.pallas_call(
        _norm_residual_kernel,
        grid=(pl.cdiv(rows, tm),),
        in_specs=[pl.BlockSpec((tm, d), lambda i: (i, 0)),
                  pl.BlockSpec((tm, d), lambda i: (i, 0))],
        out_specs=(pl.BlockSpec((tm, d), lambda i: (i, 0)),
                   pl.BlockSpec((tm, d), lambda i: (i, 0))),
        out_shape=(jax.ShapeDtypeStruct((rows, d), emb.dtype),
                   jax.ShapeDtypeStruct((rows, d), res_emb.dtype)),
        compiler_params=pltpu.CompilerParams(
            dimension_semantics=("parallel",)),
    )(emb, res_emb)
    return norm_emb, new_res


# ----------------------------------------------------------------------------
# Plain-JAX glue (data-dependent gathers / scatters).
# TODO(synk): scatter_mean / index gathers have no clean auto-tiled Pallas
#             equivalent (data-dependent scatter); kept in plain JAX.
# ----------------------------------------------------------------------------
def scatter_mean(src, index, dim_size):
    sums = jnp.zeros((dim_size, src.shape[1]), src.dtype).at[index].add(src)
    cnt = jnp.zeros((dim_size,), src.dtype).at[index].add(1.0)
    return sums / jnp.maximum(cnt, 1.0)[:, None]


def aggregator_forward(entity_emb, user_emb, edge_index, edge_type,
                       mat_row, mat_col, weight, layer_p, n_users, n_items):
    n_entities = entity_emb.shape[0]
    head, tail = edge_index[0], edge_index[1]
    edge_relation_emb = weight[edge_type]                       # [E, D]
    neigh_relation_emb = entity_emb[tail] * edge_relation_emb
    entity_agg = scatter_mean(neigh_relation_emb, head, n_entities)

    item_res_emb = entity_agg[:n_items]
    # TODO(synk): these gathers could also be folded into the fuzzy kernel via
    #             PrefetchScalarGridSpec (scalar-prefetch mat_row/mat_col).
    neigh_emb = item_res_emb[mat_col] * weight[0]
    combined_emb = user_emb[mat_row]
    user_neigh_emb = (neigh_emb + combined_emb) / 2.0

    # Pallas: membership + KAN/BN/defuzz + sigmoid + fuzzy-weight multiply fused
    weighted_user_emb = fuzzy_weighted_forward(user_neigh_emb, layer_p)

    user_agg = scatter_mean(weighted_user_emb, mat_row, n_users)
    user_emb = user_emb + user_agg

    items_u = user_agg[mat_row]
    item_emb = scatter_mean(items_u, mat_col, n_items)
    entity_emb = jnp.concatenate([item_emb, entity_emb[n_items:]], axis=0)
    return entity_emb, user_emb


def graph_conv_forward(params, user_emb, entity_emb, edge_index, edge_type,
                       mat_row, mat_col, n_users, n_items,
                       mess_dropout=False, node_dropout=False,
                       dropout_key=None, mess_dropout_rate=0.1):
    if node_dropout:
        key, dropout_key = jax.random.split(dropout_key)
        n_edges = edge_index.shape[1]
        keep = jax.random.permutation(key, n_edges)[: int(n_edges * 0.5)]
        edge_index, edge_type = edge_index[:, keep], edge_type[keep]

    entity_res_emb = entity_emb
    user_res_emb = user_emb
    for layer_p in params["layers"]:
        entity_emb, user_emb = aggregator_forward(
            entity_emb, user_emb, edge_index, edge_type,
            mat_row, mat_col, params["weight"], layer_p, n_users, n_items)
        if mess_dropout:
            # TODO(synk): could be fused into the normalize kernel with
            #             pltpu.prng_random_bits; kept in JAX (off in eval).
            k1, k2, dropout_key = jax.random.split(dropout_key, 3)
            p = mess_dropout_rate
            entity_emb = entity_emb * jax.random.bernoulli(
                k1, 1 - p, entity_emb.shape).astype(entity_emb.dtype) / (1 - p)
            user_emb = user_emb * jax.random.bernoulli(
                k2, 1 - p, user_emb.shape).astype(user_emb.dtype) / (1 - p)
        # Pallas: fused F.normalize + residual accumulation (one pass per table)
        entity_emb, entity_res_emb = normalize_and_residual(entity_emb, entity_res_emb)
        user_emb, user_res_emb = normalize_and_residual(user_emb, user_res_emb)
    return entity_res_emb, user_res_emb


# ----------------------------------------------------------------------------
# Deterministic parameter initialization (mirrors the torch __init__ shapes).
# ----------------------------------------------------------------------------
def xavier_uniform(key, shape):
    fan_in, fan_out = shape[1], shape[0]
    bound = (6.0 / (fan_in + fan_out)) ** 0.5
    return jax.random.uniform(key, shape, jnp.float32, -bound, bound)


def init_params(key, channel, n_hops, n_relations, num_rules):
    key, kw = jax.random.split(key)
    weight = xavier_uniform(kw, (n_relations, channel)) * 10.0   # scaling_factor
    layers = []
    for _ in range(n_hops):
        key, kc, ks, kkw, kkb, kdw, kdb = jax.random.split(key, 7)
        centers = xavier_uniform(kc, (num_rules, channel))
        scales = jax.random.uniform(ks, (num_rules, channel), jnp.float32, 1.0, 2.0)
        kan_w = jax.random.uniform(kkw, (num_rules,), jnp.float32, 0.5, 1.5)
        kan_b = jax.random.uniform(kkb, (num_rules,), jnp.float32, -0.1, 0.1)
        bn1_g = jnp.ones((num_rules,), jnp.float32)
        bn1_b = jnp.zeros((num_rules,), jnp.float32)
        bn2_g = jnp.ones((num_rules,), jnp.float32)
        bn2_b = jnp.zeros((num_rules,), jnp.float32)
        bnd = 1.0 / (num_rules ** 0.5)                 # kaiming_uniform(a=sqrt(5))
        defuzz_w = jax.random.uniform(kdw, (num_rules,), jnp.float32, -bnd, bnd)
        defuzz_b = jax.random.uniform(kdb, (), jnp.float32, -bnd, bnd)
        params7 = jnp.stack([kan_w, kan_b, bn1_g, bn1_b, bn2_g, bn2_b, defuzz_w])
        scalars = jnp.array([[defuzz_b, 2.75]], dtype=jnp.float32)
        layers.append(dict(centers=centers, scales=scales,
                           params=params7, scalars=scalars))
    return dict(weight=weight, layers=layers)


# ----------------------------------------------------------------------------
# Pure-JAX references (for correctness checks of the Pallas kernels).
# ----------------------------------------------------------------------------
def _fuzzy_weighted_ref(x, centers, scales, params7, scalars, batch_size=512):
    n, d = x.shape
    outs = []
    for s0 in range(0, n, batch_size):
        xc = x[s0:min(s0 + batch_size, n)].astype(jnp.float32)
        diff = xc[:, None, :] - centers[None, :, :]
        memb = jnp.sum(jnp.exp(-diff ** 2 / (2.0 * scales[None] ** 2)), axis=2) / d
        f = memb * params7[0][None, :] + params7[1][None, :]
        mu = jnp.mean(f, axis=0, keepdims=True)
        var = jnp.mean((f - mu) ** 2, axis=0, keepdims=True)
        y = (f - mu) / jnp.sqrt(var + 1e-5) * params7[2][None] + params7[3][None]
        mu2 = jnp.mean(y, axis=0, keepdims=True)
        var2 = jnp.mean((y - mu2) ** 2, axis=0, keepdims=True)
        y = (y - mu2) / jnp.sqrt(var2 + 1e-5) * params7[4][None] + params7[5][None]
        logits = jnp.sum(y * params7[6][None], axis=1, keepdims=True) + scalars[0, 0]
        sim = jax.nn.sigmoid(logits) * scalars[0, 1]
        outs.append(xc * sim)
    return jnp.concatenate(outs, axis=0)


# ----------------------------------------------------------------------------
if __name__ == "__main__":
    channel = 32
    num_rules = 8
    n_users, n_items, n_entities = 16, 24, 40
    n_relations, n_hops = 5, 2
    n_kg_edges, nnz = 128, 64

    root = jax.random.PRNGKey(0)
    kp, ku, ke, kh, kt, krel, kr, kc = jax.random.split(root, 8)

    params = init_params(kp, channel, n_hops, n_relations, num_rules)
    user_emb = jax.random.normal(ku, (n_users, channel), jnp.float32)
    entity_emb = jax.random.normal(ke, (n_entities, channel), jnp.float32)
    edge_head = jax.random.randint(kh, (n_kg_edges,), 0, n_entities)
    edge_tail = jax.random.randint(kt, (n_kg_edges,), 0, n_entities)
    edge_index = jnp.stack([edge_head, edge_tail])               # [2, E]
    edge_type = jax.random.randint(krel, (n_kg_edges,), 0, n_relations)
    mat_row = jax.random.randint(kr, (nnz,), 0, n_users)         # interact_mat rows
    mat_col = jax.random.randint(kc, (nnz,), 0, n_items)         # interact_mat cols

    # full forward pass (small shapes)
    entity_res, user_res = graph_conv_forward(
        params, user_emb, entity_emb, edge_index, edge_type, mat_row, mat_col,
        n_users, n_items, mess_dropout=False, node_dropout=False)
    jax.block_until_ready((entity_res, user_res))
    assert entity_res.shape == (n_entities, channel)
    assert user_res.shape == (n_users, channel)
    assert bool(jnp.all(jnp.isfinite(entity_res))) and bool(jnp.all(jnp.isfinite(user_res)))

    # correctness of the gridded fuzzy kernel, incl. masked partial last tile
    kx = jax.random.normal(jax.random.PRNGKey(42), (1100, channel), jnp.float32)
    lp = params["layers"][0]
    got = fuzzy_weighted_forward(kx, lp)
    want = _fuzzy_weighted_ref(kx, lp["centers"], lp["scales"],
                               lp["params"], lp["scalars"])
    jax.block_until_ready((got, want))
    assert bool(jnp.allclose(got, want, rtol=5e-3, atol=5e-3)), \
        float(jnp.max(jnp.abs(got - want)))

    # correctness of the gridded fused normalize + residual kernel
    xn = jax.random.normal(jax.random.PRNGKey(7), (5000, channel), jnp.float32)
    rn = jax.random.normal(jax.random.PRNGKey(8), (5000, channel), jnp.float32)
    got_n, got_r = normalize_and_residual(xn, rn)
    nrm = jnp.sqrt(jnp.sum(xn * xn, axis=1, keepdims=True))
    want_n = xn / jnp.maximum(nrm, 1e-12)
    jax.block_until_ready((got_n, got_r))
    assert bool(jnp.allclose(got_n, want_n, rtol=1e-4, atol=1e-4))
    assert bool(jnp.allclose(got_r, rn + want_n, rtol=1e-4, atol=1e-4))

    print("KERNEL_OK")
</pallas_src>

<mosaic_0001>
module attributes {stable_mosaic.version = 11 : i64} {
  func.func @_fuzzy_weighted_kernel(%arg0: i32, %arg1: memref<64x32xf32, #tpu.memory_space<vmem>>, %arg2: memref<8x32xf32, #tpu.memory_space<vmem>>, %arg3: memref<8x32xf32, #tpu.memory_space<vmem>>, %arg4: memref<7x8xf32, #tpu.memory_space<vmem>>, %arg5: memref<1x2xf32, #tpu.memory_space<smem>>, %arg6: memref<64x32xf32, #tpu.memory_space<vmem>>) attributes {dimension_semantics = [#tpu.dimension_semantics<parallel>], iteration_bounds = array<i64: 1>, scalar_prefetch = 0 : i64, scratch_operands = 0 : i64, tpu.core_type = #tpu.core_type<tc>, window_params = [{transform_indices = @transform_0, window_bounds = array<i64: 64, 32>}, {pipeline_mode = #tpu.pipeline_mode<synchronous>, transform_indices = @transform_1, window_bounds = array<i64: 8, 32>}, {pipeline_mode = #tpu.pipeline_mode<synchronous>, transform_indices = @transform_2, window_bounds = array<i64: 8, 32>}, {pipeline_mode = #tpu.pipeline_mode<synchronous>, transform_indices = @transform_3, window_bounds = array<i64: 7, 8>}, {transform_indices = @transform_4, window_bounds = array<i64: 1, 2>}, {transform_indices = @transform_5, window_bounds = array<i64: 64, 32>}]} {
    %c0 = arith.constant 0 : index
    %c0_0 = arith.constant 0 : index
    %0 = vector.load %arg1[%c0, %c0_0] : memref<64x32xf32, #tpu.memory_space<vmem>>, vector<64x32xf32>
    %c64_i32 = arith.constant 64 : i32
    %1 = arith.muli %arg0, %c64_i32 : i32
    %c64_i32_1 = arith.constant 64 : i32
    %2 = arith.subi %c64_i32_1, %1 : i32
    %c64_i32_2 = arith.constant 64 : i32
    %3 = arith.minsi %c64_i32_2, %2 : i32
    %4 = tpu.iota {dimensions = array<i32: 0>} : vector<64x1xi32>
    %5 = vector.broadcast %3 : i32 to vector<64x1xi32>
    %6 = arith.cmpi slt, %4, %5 : vector<64x1xi32>
    %7 = arith.sitofp %3 : i32 to f32
    %c0_3 = arith.constant 0 : index
    %c0_4 = arith.constant 0 : index
    %8 = vector.load %arg2[%c0_3, %c0_4] : memref<8x32xf32, #tpu.memory_space<vmem>>, vector<1x32xf32>
    %9 = vector.broadcast %8 : vector<1x32xf32> to vector<64x32xf32>
    %10 = arith.subf %0, %9 : vector<64x32xf32>
    %11 = arith.mulf %10, %10 : vector<64x32xf32>
    %c0_5 = arith.constant 0 : index
    %c0_6 = arith.constant 0 : index
    %12 = vector.load %arg3[%c0_5, %c0_6] : memref<8x32xf32, #tpu.memory_space<vmem>>, vector<1x32xf32>
    %13 = vector.broadcast %12 : vector<1x32xf32> to vector<64x32xf32>
    %14 = arith.mulf %11, %13 : vector<64x32xf32>
    %15 = math.exp %14 : vector<64x32xf32>
    %cst = arith.constant dense<0.000000e+00> : vector<64xf32>
    %16 = vector.multi_reduction <add>, %15, %cst [1] : vector<64x32xf32> to vector<64xf32>
    %17 = vector.shape_cast %16 : vector<64xf32> to vector<64x1xf32>
    %cst_7 = arith.constant 3.200000e+01 : f32
    %18 = vector.broadcast %cst_7 : f32 to vector<64x1xf32>
    %19 = arith.divf %17, %18 : vector<64x1xf32>
    %c1 = arith.constant 1 : index
    %c0_8 = arith.constant 0 : index
    %20 = vector.load %arg2[%c1, %c0_8] : memref<8x32xf32, #tpu.memory_space<vmem>>, vector<1x32xf32>
    %21 = vector.broadcast %20 : vector<1x32xf32> to vector<64x32xf32>
    %22 = arith.subf %0, %21 : vector<64x32xf32>
    %23 = arith.mulf %22, %22 : vector<64x32xf32>
    %c1_9 = arith.constant 1 : index
    %c0_10 = arith.constant 0 : index
    %24 = vector.load %arg3[%c1_9, %c0_10] : memref<8x32xf32, #tpu.memory_space<vmem>>, vector<1x32xf32>
    %25 = vector.broadcast %24 : vector<1x32xf32> to vector<64x32xf32>
    %26 = arith.mulf %23, %25 : vector<64x32xf32>
    %27 = math.exp %26 : vector<64x32xf32>
    %cst_11 = arith.constant dense<0.000000e+00> : vector<64xf32>
    %28 = vector.multi_reduction <add>, %27, %cst_11 [1] : vector<64x32xf32> to vector<64xf32>
    %29 = vector.shape_cast %28 : vector<64xf32> to vector<64x1xf32>
    %cst_12 = arith.constant 3.200000e+01 : f32
    %30 = vector.broadcast %cst_12 : f32 to vector<64x1xf32>
    %31 = arith.divf %29, %30 : vector<64x1xf32>
    %c2 = arith.constant 2 : index
    %c0_13 = arith.constant 0 : index
    %32 = vector.load %arg2[%c2, %c0_13] : memref<8x32xf32, #tpu.memory_space<vmem>>, vector<1x32xf32>
    %33 = vector.broadcast %32 : vector<1x32xf32> to vector<64x32xf32>
    %34 = arith.subf %0, %33 : vector<64x32xf32>
    %35 = arith.mulf %34, %34 : vector<64x32xf32>
    %c2_14 = arith.constant 2 : index
    %c0_15 = arith.constant 0 : index
    %36 = vector.load %arg3[%c2_14, %c0_15] : memref<8x32xf32, #tpu.memory_space<vmem>>, vector<1x32xf32>
    %37 = vector.broadcast %36 : vector<1x32xf32> to vector<64x32xf32>
    %38 = arith.mulf %35, %37 : vector<64x32xf32>
    %39 = math.exp %38 : vector<64x32xf32>
    %cst_16 = arith.constant dense<0.000000e+00> : vector<64xf32>
    %40 = vector.multi_reduction <add>, %39, %cst_16 [1] : vector<64x32xf32> to vector<64xf32>
    %41 = vector.shape_cast %40 : vector<64xf32> to vector<64x1xf32>
    %cst_17 = arith.constant 3.200000e+01 : f32
    %42 = vector.broadcast %cst_17 : f32 to vector<64x1xf32>
    %43 = arith.divf %41, %42 : vector<64x1xf32>
    %c3 = arith.constant 3 : index
    %c0_18 = arith.constant 0 : index
    %44 = vector.load %arg2[%c3, %c0_18] : memref<8x32xf32, #tpu.memory_space<vmem>>, vector<1x32xf32>
    %45 = vector.broadcast %44 : vector<1x32xf32> to vector<64x32xf32>
    %46 = arith.subf %0, %45 : vector<64x32xf32>
    %47 = arith.mulf %46, %46 : vector<64x32xf32>
    %c3_19 = arith.constant 3 : index
    %c0_20 = arith.constant 0 : index
    %48 = vector.load %arg3[%c3_19, %c0_20] : memref<8x32xf32, #tpu.memory_space<vmem>>, vector<1x32xf32>
    %49 = vector.broadcast %48 : vector<1x32xf32> to vector<64x32xf32>
    %50 = arith.mulf %47, %49 : vector<64x32xf32>
    %51 = math.exp %50 : vector<64x32xf32>
    %cst_21 = arith.constant dense<0.000000e+00> : vector<64xf32>
    %52 = vector.multi_reduction <add>, %51, %cst_21 [1] : vector<64x32xf32> to vector<64xf32>
    %53 = vector.shape_cast %52 : vector<64xf32> to vector<64x1xf32>
    %cst_22 = arith.constant 3.200000e+01 : f32
    %54 = vector.broadcast %cst_22 : f32 to vector<64x1xf32>
    %55 = arith.divf %53, %54 : vector<64x1xf32>
    %c4 = arith.constant 4 : index
    %c0_23 = arith.constant 0 : index
    %56 = vector.load %arg2[%c4, %c0_23] : memref<8x32xf32, #tpu.memory_space<vmem>>, vector<1x32xf32>
    %57 = vector.broadcast %56 : vector<1x32xf32> to vector<64x32xf32>
    %58 = arith.subf %0, %57 : vector<64x32xf32>
    %59 = arith.mulf %58, %58 : vector<64x32xf32>
    %c4_24 = arith.constant 4 : index
    %c0_25 = arith.constant 0 : index
    %60 = vector.load %arg3[%c4_24, %c0_25] : memref<8x32xf32, #tpu.memory_space<vmem>>, vector<1x32xf32>
    %61 = vector.broadcast %60 : vector<1x32xf32> to vector<64x32xf32>
    %62 = arith.mulf %59, %61 : vector<64x32xf32>
    %63 = math.exp %62 : vector<64x32xf32>
    %cst_26 = arith.constant dense<0.000000e+00> : vector<64xf32>
    %64 = vector.multi_reduction <add>, %63, %cst_26 [1] : vector<64x32xf32> to vector<64xf32>
    %65 = vector.shape_cast %64 : vector<64xf32> to vector<64x1xf32>
    %cst_27 = arith.constant 3.200000e+01 : f32
    %66 = vector.broadcast %cst_27 : f32 to vector<64x1xf32>
    %67 = arith.divf %65, %66 : vector<64x1xf32>
    %c5 = arith.constant 5 : index
    %c0_28 = arith.constant 0 : index
    %68 = vector.load %arg2[%c5, %c0_28] : memref<8x32xf32, #tpu.memory_space<vmem>>, vector<1x32xf32>
    %69 = vector.broadcast %68 : vector<1x32xf32> to vector<64x32xf32>
    %70 = arith.subf %0, %69 : vector<64x32xf32>
    %71 = arith.mulf %70, %70 : vector<64x32xf32>
    %c5_29 = arith.constant 5 : index
    %c0_30 = arith.constant 0 : index
    %72 = vector.load %arg3[%c5_29, %c0_30] : memref<8x32xf32, #tpu.memory_space<vmem>>, vector<1x32xf32>
    %73 = vector.broadcast %72 : vector<1x32xf32> to vector<64x32xf32>
    %74 = arith.mulf %71, %73 : vector<64x32xf32>
    %75 = math.exp %74 : vector<64x32xf32>
    %cst_31 = arith.constant dense<0.000000e+00> : vector<64xf32>
    %76 = vector.multi_reduction <add>, %75, %cst_31 [1] : vector<64x32xf32> to vector<64xf32>
    %77 = vector.shape_cast %76 : vector<64xf32> to vector<64x1xf32>
    %cst_32 = arith.constant 3.200000e+01 : f32
    %78 = vector.broadcast %cst_32 : f32 to vector<64x1xf32>
    %79 = arith.divf %77, %78 : vector<64x1xf32>
    %c6 = arith.constant 6 : index
    %c0_33 = arith.constant 0 : index
    %80 = vector.load %arg2[%c6, %c0_33] : memref<8x32xf32, #tpu.memory_space<vmem>>, vector<1x32xf32>
    %81 = vector.broadcast %80 : vector<1x32xf32> to vector<64x32xf32>
    %82 = arith.subf %0, %81 : vector<64x32xf32>
    %83 = arith.mulf %82, %82 : vector<64x32xf32>
    %c6_34 = arith.constant 6 : index
    %c0_35 = arith.constant 0 : index
    %84 = vector.load %arg3[%c6_34, %c0_35] : memref<8x32xf32, #tpu.memory_space<vmem>>, vector<1x32xf32>
    %85 = vector.broadcast %84 : vector<1x32xf32> to vector<64x32xf32>
    %86 = arith.mulf %83, %85 : vector<64x32xf32>
    %87 = math.exp %86 : vector<64x32xf32>
    %cst_36 = arith.constant dense<0.000000e+00> : vector<64xf32>
    %88 = vector.multi_reduction <add>, %87, %cst_36 [1] : vector<64x32xf32> to vector<64xf32>
    %89 = vector.shape_cast %88 : vector<64xf32> to vector<64x1xf32>
    %cst_37 = arith.constant 3.200000e+01 : f32
    %90 = vector.broadcast %cst_37 : f32 to vector<64x1xf32>
    %91 = arith.divf %89, %90 : vector<64x1xf32>
    %c7 = arith.constant 7 : index
    %c0_38 = arith.constant 0 : index
    %92 = vector.load %arg2[%c7, %c0_38] : memref<8x32xf32, #tpu.memory_space<vmem>>, vector<1x32xf32>
    %93 = vector.broadcast %92 : vector<1x32xf32> to vector<64x32xf32>
    %94 = arith.subf %0, %93 : vector<64x32xf32>
    %95 = arith.mulf %94, %94 : vector<64x32xf32>
    %c7_39 = arith.constant 7 : index
    %c0_40 = arith.constant 0 : index
    %96 = vector.load %arg3[%c7_39, %c0_40] : memref<8x32xf32, #tpu.memory_space<vmem>>, vector<1x32xf32>
    %97 = vector.broadcast %96 : vector<1x32xf32> to vector<64x32xf32>
    %98 = arith.mulf %95, %97 : vector<64x32xf32>
    %99 = math.exp %98 : vector<64x32xf32>
    %cst_41 = arith.constant dense<0.000000e+00> : vector<64xf32>
    %100 = vector.multi_reduction <add>, %99, %cst_41 [1] : vector<64x32xf32> to vector<64xf32>
    %101 = vector.shape_cast %100 : vector<64xf32> to vector<64x1xf32>
    %cst_42 = arith.constant 3.200000e+01 : f32
    %102 = vector.broadcast %cst_42 : f32 to vector<64x1xf32>
    %103 = arith.divf %101, %102 : vector<64x1xf32>
    %104 = tpu.concatenate %19, %31, %43, %55, %67, %79, %91, %103 in 1 : vector<64x1xf32>, vector<64x1xf32>, vector<64x1xf32>, vector<64x1xf32>, vector<64x1xf32>, vector<64x1xf32>, vector<64x1xf32>, vector<64x1xf32> -> vector<64x8xf32>
    %c0_43 = arith.constant 0 : index
    %c0_44 = arith.constant 0 : index
    %105 = vector.load %arg4[%c0_43, %c0_44] : memref<7x8xf32, #tpu.memory_space<vmem>>, vector<1x8xf32>
    %c1_45 = arith.constant 1 : index
    %c0_46 = arith.constant 0 : index
    %106 = vector.load %arg4[%c1_45, %c0_46] : memref<7x8xf32, #tpu.memory_space<vmem>>, vector<1x8xf32>
    %c2_47 = arith.constant 2 : index
    %c0_48 = arith.constant 0 : index
    %107 = vector.load %arg4[%c2_47, %c0_48] : memref<7x8xf32, #tpu.memory_space<vmem>>, vector<1x8xf32>
    %c3_49 = arith.constant 3 : index
    %c0_50 = arith.constant 0 : index
    %108 = vector.load %arg4[%c3_49, %c0_50] : memref<7x8xf32, #tpu.memory_space<vmem>>, vector<1x8xf32>
    %c4_51 = arith.constant 4 : index
    %c0_52 = arith.constant 0 : index
    %109 = vector.load %arg4[%c4_51, %c0_52] : memref<7x8xf32, #tpu.memory_space<vmem>>, vector<1x8xf32>
    %c5_53 = arith.constant 5 : index
    %c0_54 = arith.constant 0 : index
    %110 = vector.load %arg4[%c5_53, %c0_54] : memref<7x8xf32, #tpu.memory_space<vmem>>, vector<1x8xf32>
    %c6_55 = arith.constant 6 : index
    %c0_56 = arith.constant 0 : index
    %111 = vector.load %arg4[%c6_55, %c0_56] : memref<7x8xf32, #tpu.memory_space<vmem>>, vector<1x8xf32>
    %112 = vector.broadcast %105 : vector<1x8xf32> to vector<64x8xf32>
    %113 = arith.mulf %104, %112 : vector<64x8xf32>
    %114 = vector.broadcast %106 : vector<1x8xf32> to vector<64x8xf32>
    %115 = arith.addf %113, %114 : vector<64x8xf32>
    %cst_57 = arith.constant 0.000000e+00 : f32
    %116 = vector.shape_cast %6 : vector<64x1xi1> to vector<64x1xi1>
    %117 = vector.broadcast %116 : vector<64x1xi1> to vector<64x8xi1>
    %118 = vector.broadcast %cst_57 : f32 to vector<64x8xf32>
    %119 = arith.select %117, %115, %118 : vector<64x8xi1>, vector<64x8xf32>
    %cst_58 = arith.constant dense<0.000000e+00> : vector<8xf32>
    %120 = vector.multi_reduction <add>, %119, %cst_58 [0] : vector<64x8xf32> to vector<8xf32>
    %121 = vector.shape_cast %120 : vector<8xf32> to vector<1x8xf32>
    %122 = vector.broadcast %7 : f32 to vector<1x8xf32>
    %123 = arith.divf %121, %122 : vector<1x8xf32>
    %124 = vector.broadcast %123 : vector<1x8xf32> to vector<64x8xf32>
    %125 = arith.subf %115, %124 : vector<64x8xf32>
    %cst_59 = arith.constant 0.000000e+00 : f32
    %126 = vector.shape_cast %6 : vector<64x1xi1> to vector<64x1xi1>
    %127 = vector.broadcast %126 : vector<64x1xi1> to vector<64x8xi1>
    %128 = vector.broadcast %cst_59 : f32 to vector<64x8xf32>
    %129 = arith.select %127, %125, %128 : vector<64x8xi1>, vector<64x8xf32>
    %130 = arith.mulf %129, %129 : vector<64x8xf32>
    %cst_60 = arith.constant dense<0.000000e+00> : vector<8xf32>
    %131 = vector.multi_reduction <add>, %130, %cst_60 [0] : vector<64x8xf32> to vector<8xf32>
    %132 = vector.shape_cast %131 : vector<8xf32> to vector<1x8xf32>
    %133 = vector.broadcast %7 : f32 to vector<1x8xf32>
    %134 = arith.divf %132, %133 : vector<1x8xf32>
    %135 = vector.broadcast %123 : vector<1x8xf32> to vector<64x8xf32>
    %136 = arith.subf %115, %135 : vector<64x8xf32>
    %cst_61 = arith.constant 9.99999974E-6 : f32
    %137 = vector.broadcast %cst_61 : f32 to vector<1x8xf32>
    %138 = arith.addf %134, %137 : vector<1x8xf32>
    %139 = math.rsqrt %138 : vector<1x8xf32>
    %140 = vector.broadcast %139 : vector<1x8xf32> to vector<64x8xf32>
    %141 = arith.mulf %136, %140 : vector<64x8xf32>
    %142 = vector.broadcast %107 : vector<1x8xf32> to vector<64x8xf32>
    %143 = arith.mulf %141, %142 : vector<64x8xf32>
    %144 = vector.broadcast %108 : vector<1x8xf32> to vector<64x8xf32>
    %145 = arith.addf %143, %144 : vector<64x8xf32>
    %cst_62 = arith.constant 0.000000e+00 : f32
    %146 = vector.shape_cast %6 : vector<64x1xi1> to vector<64x1xi1>
    %147 = vector.broadcast %146 : vector<64x1xi1> to vector<64x8xi1>
    %148 = vector.broadcast %cst_62 : f32 to vector<64x8xf32>
    %149 = arith.select %147, %145, %148 : vector<64x8xi1>, vector<64x8xf32>
    %cst_63 = arith.constant dense<0.000000e+00> : vector<8xf32>
    %150 = vector.multi_reduction <add>, %149, %cst_63 [0] : vector<64x8xf32> to vector<8xf32>
    %151 = vector.shape_cast %150 : vector<8xf32> to vector<1x8xf32>
    %152 = vector.broadcast %7 : f32 to vector<1x8xf32>
    %153 = arith.divf %151, %152 : vector<1x8xf32>
    %154 = vector.broadcast %153 : vector<1x8xf32> to vector<64x8xf32>
    %155 = arith.subf %145, %154 : vector<64x8xf32>
    %cst_64 = arith.constant 0.000000e+00 : f32
    %156 = vector.shape_cast %6 : vector<64x1xi1> to vector<64x1xi1>
    %157 = vector.broadcast %156 : vector<64x1xi1> to vector<64x8xi1>
    %158 = vector.broadcast %cst_64 : f32 to vector<64x8xf32>
    %159 = arith.select %157, %155, %158 : vector<64x8xi1>, vector<64x8xf32>
    %160 = arith.mulf %159, %159 : vector<64x8xf32>
    %cst_65 = arith.constant dense<0.000000e+00> : vector<8xf32>
    %161 = vector.multi_reduction <add>, %160, %cst_65 [0] : vector<64x8xf32> to vector<8xf32>
    %162 = vector.shape_cast %161 : vector<8xf32> to vector<1x8xf32>
    %163 = vector.broadcast %7 : f32 to vector<1x8xf32>
    %164 = arith.divf %162, %163 : vector<1x8xf32>
    %165 = vector.broadcast %153 : vector<1x8xf32> to vector<64x8xf32>
    %166 = arith.subf %145, %165 : vector<64x8xf32>
    %cst_66 = arith.constant 9.99999974E-6 : f32
    %167 = vector.broadcast %cst_66 : f32 to vector<1x8xf32>
    %168 = arith.addf %164, %167 : vector<1x8xf32>
    %169 = math.rsqrt %168 : vector<1x8xf32>
    %170 = vector.broadcast %169 : vector<1x8xf32> to vector<64x8xf32>
    %171 = arith.mulf %166, %170 : vector<64x8xf32>
    %172 = vector.broadcast %109 : vector<1x8xf32> to vector<64x8xf32>
    %173 = arith.mulf %171, %172 : vector<64x8xf32>
    %174 = vector.broadcast %110 : vector<1x8xf32> to vector<64x8xf32>
    %175 = arith.addf %173, %174 : vector<64x8xf32>
    %176 = vector.broadcast %111 : vector<1x8xf32> to vector<64x8xf32>
    %177 = arith.mulf %175, %176 : vector<64x8xf32>
    %cst_67 = arith.constant dense<0.000000e+00> : vector<64xf32>
    %178 = vector.multi_reduction <add>, %177, %cst_67 [1] : vector<64x8xf32> to vector<64xf32>
    %179 = vector.shape_cast %178 : vector<64xf32> to vector<64x1xf32>
    %c0_68 = arith.constant 0 : index
    %c0_69 = arith.constant 0 : index
    %180 = memref.load %arg5[%c0_68, %c0_69] : memref<1x2xf32, #tpu.memory_space<smem>>
    %181 = vector.broadcast %180 : f32 to vector<64x1xf32>
    %182 = arith.addf %179, %181 : vector<64x1xf32>
    %183 = arith.negf %182 : vector<64x1xf32>
    %184 = math.exp %183 : vector<64x1xf32>
    %cst_70 = arith.constant 1.000000e+00 : f32
    %185 = vector.broadcast %cst_70 : f32 to vector<64x1xf32>
    %186 = arith.addf %185, %184 : vector<64x1xf32>
    %187 = arith.divf %185, %186 : vector<64x1xf32>
    %c0_71 = arith.constant 0 : index
    %c1_72 = arith.constant 1 : index
    %188 = memref.load %arg5[%c0_71, %c1_72] : memref<1x2xf32, #tpu.memory_space<smem>>
    %189 = vector.broadcast %188 : f32 to vector<64x1xf32>
    %190 = arith.mulf %187, %189 : vector<64x1xf32>
    %191 = vector.broadcast %190 : vector<64x1xf32> to vector<64x32xf32>
    %192 = arith.mulf %0, %191 : vector<64x32xf32>
    %c0_73 = arith.constant 0 : index
    %c0_74 = arith.constant 0 : index
    %193 = vector.load %arg6[%c0_73, %c0_74] : memref<64x32xf32, #tpu.memory_space<vmem>>, vector<64x32xf32>
    tpu.vector_store %arg6[%c0_73, %c0_74], %192 {strides = array<i32>} : memref<64x32xf32, #tpu.memory_space<vmem>>, vector<64x32xf32>,
    return
  }
  func.func @transform_0(%arg0: i32) -> (i32, i32) {
    %c0_i32 = arith.constant 0 : i32
    %c0_i32_0 = arith.constant 0 : i32
    return %arg0, %c0_i32 : i32, i32
  }
  func.func @transform_1(%arg0: i32) -> (i32, i32) {
    %c0_i32 = arith.constant 0 : i32
    %c0_i32_0 = arith.constant 0 : i32
    %c0_i32_1 = arith.constant 0 : i32
    return %c0_i32, %c0_i32_0 : i32, i32
  }
  func.func @transform_2(%arg0: i32) -> (i32, i32) {
    %c0_i32 = arith.constant 0 : i32
    %c0_i32_0 = arith.constant 0 : i32
    %c0_i32_1 = arith.constant 0 : i32
    return %c0_i32, %c0_i32_0 : i32, i32
  }
  func.func @transform_3(%arg0: i32) -> (i32, i32) {
    %c0_i32 = arith.constant 0 : i32
    %c0_i32_0 = arith.constant 0 : i32
    %c0_i32_1 = arith.constant 0 : i32
    return %c0_i32, %c0_i32_0 : i32, i32
  }
  func.func @transform_4(%arg0: i32) -> (i32, i32) {
    %c0_i32 = arith.constant 0 : i32
    %c0_i32_0 = arith.constant 0 : i32
    %c0_i32_1 = arith.constant 0 : i32
    return %c0_i32, %c0_i32_0 : i32, i32
  }
  func.func @transform_5(%arg0: i32) -> (i32, i32) {
    %c0_i32 = arith.constant 0 : i32
    %c0_i32_0 = arith.constant 0 : i32
    return %arg0, %c0_i32 : i32, i32
  }
}

</mosaic_0001>

<llo_original>
// kernel: tpu_custom_call.1
$region0: #{tpu_custom_call.1}
  #allocation0 [shape = 'u32[]', space=smem, size = 0x4, offset = 0x4, fixed_abs, tag = 'smem constant byte address 0x4 - core index']
  #allocation1 [shape = 'u32[144,128]{1,0:T(1,128)}', space=vmem, size = 0x12000, scoped, tag = 'internal scratch']
  %s0 = inlined_call_operand.vmem [shape: f32[64,32], index: 0, kind: input, shape index: {}]
  %s1 = inlined_call_operand.vmem [shape: f32[8,32], index: 1, kind: input, shape index: {}]
  %s2 = inlined_call_operand.vmem [shape: f32[8,32], index: 2, kind: input, shape index: {}]
  %s3 = inlined_call_operand.vmem [shape: f32[7,8], index: 3, kind: input, shape index: {}]
  %s4 = inlined_call_operand.vmem [shape: f32[1,2], index: 4, kind: input, shape index: {}]
  %s5 = inlined_call_operand.vmem [shape: f32[64,32], index: 5, kind: output, shape index: {}]
  %s6 = sld [smem:[#allocation0]]
  $region34: #{tpu_custom_call.1} parent=0
    _
  %s8 = ssub.s32 1, %s6
  %s9 = scalar_select 0, %s8, %s6
  $region1: #{tpu_custom_call.1} parent=0
    #allocation2 [shape = 'u8[512]{0}', space=smem, size = 0x200, scoped, tag = 'input window, operand 4, single buffered']
    #allocation3 [shape = 's32[1]{0}', space=sflag, size = 0x4, scoped, tag = 'scoped memory for tpu_custom_call.1']
    %10 = vsyncpa [#allocation3], 0
    // Predicated region
    $region2: #{tpu_custom_call.1} parent=1 // pred_check
      _
    $region3: #{tpu_custom_call.1} parent=1 // pred_check_branch
      %12 = sbr.rel (0) target = $region5
    $region4: #{tpu_custom_call.1} parent=1 // pred_region
      _
    $region5: #{tpu_custom_call.1} parent=1 // pred_fallthru
      _
    // Predicated region
    $region6: #{tpu_custom_call.1} parent=1 // pred_check
      _
    $region7: #{tpu_custom_call.1} parent=1 // pred_check_branch
      %14 = sbr.rel (0) target = $region9
    $region8: #{tpu_custom_call.1} parent=1 // pred_region
      _
    $region9: #{tpu_custom_call.1} parent=1 // pred_fallthru
      _
    // Predicated region
    $region10: #{tpu_custom_call.1} parent=1 // pred_check
      _
    $region11: #{tpu_custom_call.1} parent=1 // pred_check_branch
      %16 = sbr.rel (0) target = $region13
    $region12: #{tpu_custom_call.1} parent=1 // pred_region
      _
    $region13: #{tpu_custom_call.1} parent=1 // pred_fallthru
      _
    // Predicated region
    $region14: #{tpu_custom_call.1} parent=1 // pred_check
      _
    $region15: #{tpu_custom_call.1} parent=1 // pred_check_branch
      %18 = sbr.rel (0) target = $region17
    $region16: #{tpu_custom_call.1} parent=1 // pred_region
      _
    $region17: #{tpu_custom_call.1} parent=1 // pred_fallthru
      _
    // Predicated region
    $region18: #{tpu_custom_call.1} parent=1 // pred_check
      _
    $region19: #{tpu_custom_call.1} parent=1 // pred_check_branch
      %20 = sbr.rel (0) target = $region21
    $region20: #{tpu_custom_call.1} parent=1 // pred_region
      %s22 = ssub.s32 16, 16
      %23 = vsyncadd [#allocation3], %s22
      %s25 = sshll.u32 %s4, 4
      %s26 = int_to_ptr.vmem [resolvable:$true] %s25
      %28 = dma.vmem_to_smem %s26, 16, [#allocation2], [#allocation3]
    $region21: #{tpu_custom_call.1} parent=1 // pred_fallthru
      _
    // Predicated region
    $region22: #{tpu_custom_call.1} parent=1 // pred_check
      _
    $region23: #{tpu_custom_call.1} parent=1 // pred_check_branch
      %30 = sbr.rel (0) target = $region25
    $region24: #{tpu_custom_call.1} parent=1 // pred_region
      %31 = dma.done [#allocation3], 16
    $region25: #{tpu_custom_call.1} parent=1 // pred_fallthru
      _
    %32 = sfence
    %v33 = vld [vmem:[%s0] sm:$0xff]
    %v34 = vld [vmem:[%s0 + $0x8] sm:$0xff]
    %v35 = vld [vmem:[%s0 + $0x10] sm:$0xff]
    %v36 = vld [vmem:[%s0 + $0x18] sm:$0xff]
    %v37 = vld [vmem:[%s0 + $0x20] sm:$0xff]
    %v38 = vld [vmem:[%s0 + $0x28] sm:$0xff]
    %v39 = vld [vmem:[%s0 + $0x30] sm:$0xff]
    %v40 = vld [vmem:[%s0 + $0x38] sm:$0xff]
    %s41 = smul.u32 0, 64
    %s42 = ssub.s32 64, %s41
    %p43 = scmp.lt.s32.totalorder %s42, 64
    %s44 = scalar_select %p43, %s42, 64
    %v45 = vlaneseq
    %v46 = vshrl.u32 %v45, 7
    %v47 = vadd.s32 %v46, 8
    %v48 = vadd.s32 %v46, 16
    %v49 = vadd.s32 %v46, 24
    %v50 = vadd.s32 %v46, 32
    %v51 = vadd.s32 %v46, 40
    %v52 = vadd.s32 %v46, 48
    %v53 = vadd.s32 %v46, 56
    %v54 = vstv %s44
    %vm55 = vcmp.lt.s32.totalorder %v46, %v54
    %vm56 = vcmp.lt.s32.totalorder %v47, %v54
    %vm57 = vcmp.lt.s32.totalorder %v48, %v54
    %vm58 = vcmp.lt.s32.totalorder %v49, %v54
    %vm59 = vcmp.lt.s32.totalorder %v50, %v54
    %vm60 = vcmp.lt.s32.totalorder %v51, %v54
    %vm61 = vcmp.lt.s32.totalorder %v52, %v54
    %vm62 = vcmp.lt.s32.totalorder %v53, %v54
    %s63 = scvt.s32.f32 %s44
    %v64 = vld [vmem:[%s1] sm:$0x1]
    %v65 = vlaneseq
    %v66 = vshrl.u32 %v65, 7
    %v67 = vsub.s32 0, %v66
    %v68 = vrot.slane %v64, %v67
    %v69 = vsub.f32 %v33, %v68
    %v70 = vsub.f32 %v34, %v68
    %v71 = vsub.f32 %v35, %v68
    %v72 = vsub.f32 %v36, %v68
    %v73 = vsub.f32 %v37, %v68
    %v74 = vsub.f32 %v38, %v68
    %v75 = vsub.f32 %v39, %v68
    %v76 = vsub.f32 %v40, %v68
    %v77 = vmul.f32 %v69, %v69
    %v78 = vmul.f32 %v70, %v70
    %v79 = vmul.f32 %v71, %v71
    %v80 = vmul.f32 %v72, %v72
    %v81 = vmul.f32 %v73, %v73
    %v82 = vmul.f32 %v74, %v74
    %v83 = vmul.f32 %v75, %v75
    %v84 = vmul.f32 %v76, %v76
    %v85 = vld [vmem:[%s2] sm:$0x1]
    %v86 = vlaneseq
    %v87 = vshrl.u32 %v86, 7
    %v88 = vsub.s32 0, %v87
    %v89 = vrot.slane %v85, %v88
    %v90 = vmul.f32 %v77, %v89
    %v91 = vmul.f32 %v78, %v89
    %v92 = vmul.f32 %v79, %v89
    %v93 = vmul.f32 %v80, %v89
    %v94 = vmul.f32 %v81, %v89
    %v95 = vmul.f32 %v82, %v89
    %v96 = vmul.f32 %v83, %v89
    %v97 = vmul.f32 %v84, %v89
    %v98 = vmul.f32 %v90, 1.442695
    %v99 = vpow.pop %v98
    %v100 = vmul.f32 %v91, 1.442695
    %v101 = vpow.pop %v100
    %v102 = vmul.f32 %v92, 1.442695
    %v103 = vpow.pop %v102
    %v104 = vmul.f32 %v93, 1.442695
    %v105 = vpow.pop %v104
    %v106 = vmul.f32 %v94, 1.442695
    %v107 = vpow.pop %v106
    %v108 = vmul.f32 %v95, 1.442695
    %v109 = vpow.pop %v108
    %v110 = vmul.f32 %v96, 1.442695
    %v111 = vpow.pop %v110
    %v112 = vmul.f32 %v97, 1.442695
    %v113 = vpow.pop %v112
    %vm114 = vcmask 261120
    %v115 = vsel %vm114, %v99, 0.0
    %116 = vadd.xlane.f32.xlu0 %v115
    %v117 = vpop.xlane.xlu0 %116
    %v118 = vsel %vm114, %v101, 0.0
    %119 = vadd.xlane.f32.xlu0 %v118
    %v120 = vpop.xlane.xlu0 %119
    %v121 = vsel %vm114, %v103, 0.0
    %122 = vadd.xlane.f32.xlu0 %v121
    %v123 = vpop.xlane.xlu0 %122
    %v124 = vsel %vm114, %v105, 0.0
    %125 = vadd.xlane.f32.xlu0 %v124
    %v126 = vpop.xlane.xlu0 %125
    %v127 = vsel %vm114, %v107, 0.0
    %128 = vadd.xlane.f32.xlu0 %v127
    %v129 = vpop.xlane.xlu0 %128
    %v130 = vsel %vm114, %v109, 0.0
    %131 = vadd.xlane.f32.xlu0 %v130
    %v132 = vpop.xlane.xlu0 %131
    %v133 = vsel %vm114, %v111, 0.0
    %134 = vadd.xlane.f32.xlu0 %v133
    %v135 = vpop.xlane.xlu0 %134
    %v136 = vsel %vm114, %v113, 0.0
    %137 = vadd.xlane.f32.xlu0 %v136
    %v138 = vpop.xlane.xlu0 %137
    %v139 = vrcp.pop 32.0
    %v140 = vmul.f32 %v117, %v139
    %v141 = vmul.f32 %v120, %v139
    %v142 = vmul.f32 %v123, %v139
    %v143 = vmul.f32 %v126, %v139
    %v144 = vmul.f32 %v129, %v139
    %v145 = vmul.f32 %v132, %v139
    %v146 = vmul.f32 %v135, %v139
    %v147 = vmul.f32 %v138, %v139
    %v148 = vld [vmem:[%s1 + $0x1] sm:$0x1]
    %v149 = vlaneseq
    %v150 = vshrl.u32 %v149, 7
    %v151 = vsub.s32 0, %v150
    %v152 = vrot.slane %v148, %v151
    %v153 = vsub.f32 %v33, %v152
    %v154 = vsub.f32 %v34, %v152
    %v155 = vsub.f32 %v35, %v152
    %v156 = vsub.f32 %v36, %v152
    %v157 = vsub.f32 %v37, %v152
    %v158 = vsub.f32 %v38, %v152
    %v159 = vsub.f32 %v39, %v152
    %v160 = vsub.f32 %v40, %v152
    %v161 = vmul.f32 %v153, %v153
    %v162 = vmul.f32 %v154, %v154
    %v163 = vmul.f32 %v155, %v155
    %v164 = vmul.f32 %v156, %v156
    %v165 = vmul.f32 %v157, %v157
    %v166 = vmul.f32 %v158, %v158
    %v167 = vmul.f32 %v159, %v159
    %v168 = vmul.f32 %v160, %v160
    %v169 = vld [vmem:[%s2 + $0x1] sm:$0x1]
    %v170 = vlaneseq
    %v171 = vshrl.u32 %v170, 7
    %v172 = vsub.s32 0, %v171
    %v173 = vrot.slane %v169, %v172
    %v174 = vmul.f32 %v161, %v173
    %v175 = vmul.f32 %v162, %v173
    %v176 = vmul.f32 %v163, %v173
    %v177 = vmul.f32 %v164, %v173
    %v178 = vmul.f32 %v165, %v173
    %v179 = vmul.f32 %v166, %v173
    %v180 = vmul.f32 %v167, %v173
    %v181 = vmul.f32 %v168, %v173
    %v182 = vmul.f32 %v174, 1.442695
    %v183 = vpow.pop %v182
    %v184 = vmul.f32 %v175, 1.442695
    %v185 = vpow.pop %v184
    %v186 = vmul.f32 %v176, 1.442695
    %v187 = vpow.pop %v186
    %v188 = vmul.f32 %v177, 1.442695
    %v189 = vpow.pop %v188
    %v190 = vmul.f32 %v178, 1.442695
    %v191 = vpow.pop %v190
    %v192 = vmul.f32 %v179, 1.442695
    %v193 = vpow.pop %v192
    %v194 = vmul.f32 %v180, 1.442695
    %v195 = vpow.pop %v194
    %v196 = vmul.f32 %v181, 1.442695
    %v197 = vpow.pop %v196
    %v198 = vsel %vm114, %v183, 0.0
    %199 = vadd.xlane.f32.xlu0 %v198
    %v200 = vpop.xlane.xlu0 %199
    %v201 = vsel %vm114, %v185, 0.0
    %202 = vadd.xlane.f32.xlu0 %v201
    %v203 = vpop.xlane.xlu0 %202
    %v204 = vsel %vm114, %v187, 0.0
    %205 = vadd.xlane.f32.xlu0 %v204
    %v206 = vpop.xlane.xlu0 %205
    %v207 = vsel %vm114, %v189, 0.0
    %208 = vadd.xlane.f32.xlu0 %v207
    %v209 = vpop.xlane.xlu0 %208
    %v210 = vsel %vm114, %v191, 0.0
    %211 = vadd.xlane.f32.xlu0 %v210
    %v212 = vpop.xlane.xlu0 %211
    %v213 = vsel %vm114, %v193, 0.0
    %214 = vadd.xlane.f32.xlu0 %v213
    %v215 = vpop.xlane.xlu0 %214
    %v216 = vsel %vm114, %v195, 0.0
    %217 = vadd.xlane.f32.xlu0 %v216
    %v218 = vpop.xlane.xlu0 %217
    %v219 = vsel %vm114, %v197, 0.0
    %220 = vadd.xlane.f32.xlu0 %v219
    %v221 = vpop.xlane.xlu0 %220
    %v222 = vmul.f32 %v200, %v139
    %v223 = vmul.f32 %v203, %v139
    %v224 = vmul.f32 %v206, %v139
    %v225 = vmul.f32 %v209, %v139
    %v226 = vmul.f32 %v212, %v139
    %v227 = vmul.f32 %v215, %v139
    %v228 = vmul.f32 %v218, %v139
    %v229 = vmul.f32 %v221, %v139
    %v230 = vld [vmem:[%s1 + $0x2] sm:$0x1]
    %v231 = vlaneseq
    %v232 = vshrl.u32 %v231, 7
    %v233 = vsub.s32 0, %v232
    %v234 = vrot.slane %v230, %v233
    %v235 = vsub.f32 %v33, %v234
    %v236 = vsub.f32 %v34, %v234
    %v237 = vsub.f32 %v35, %v234
    %v238 = vsub.f32 %v36, %v234
    %v239 = vsub.f32 %v37, %v234
    %v240 = vsub.f32 %v38, %v234
    %v241 = vsub.f32 %v39, %v234
    %v242 = vsub.f32 %v40, %v234
    %v243 = vmul.f32 %v235, %v235
    %v244 = vmul.f32 %v236, %v236
    %v245 = vmul.f32 %v237, %v237
    %v246 = vmul.f32 %v238, %v238
    %v247 = vmul.f32 %v239, %v239
    %v248 = vmul.f32 %v240, %v240
    %v249 = vmul.f32 %v241, %v241
    %v250 = vmul.f32 %v242, %v242
    %v251 = vld [vmem:[%s2 + $0x2] sm:$0x1]
    %v252 = vlaneseq
    %v253 = vshrl.u32 %v252, 7
    %v254 = vsub.s32 0, %v253
    %v255 = vrot.slane %v251, %v254
    %v256 = vmul.f32 %v243, %v255
    %v257 = vmul.f32 %v244, %v255
    %v258 = vmul.f32 %v245, %v255
    %v259 = vmul.f32 %v246, %v255
    %v260 = vmul.f32 %v247, %v255
    %v261 = vmul.f32 %v248, %v255
    %v262 = vmul.f32 %v249, %v255
    %v263 = vmul.f32 %v250, %v255
    %v264 = vmul.f32 %v256, 1.442695
    %v265 = vpow.pop %v264
    %v266 = vmul.f32 %v257, 1.442695
    %v267 = vpow.pop %v266
    %v268 = vmul.f32 %v258, 1.442695
    %v269 = vpow.pop %v268
    %v270 = vmul.f32 %v259, 1.442695
    %v271 = vpow.pop %v270
    %v272 = vmul.f32 %v260, 1.442695
    %v273 = vpow.pop %v272
    %v274 = vmul.f32 %v261, 1.442695
    %v275 = vpow.pop %v274
    %v276 = vmul.f32 %v262, 1.442695
    %v277 = vpow.pop %v276
    %v278 = vmul.f32 %v263, 1.442695
    %v279 = vpow.pop %v278
    %v280 = vsel %vm114, %v265, 0.0
    %281 = vadd.xlane.f32.xlu0 %v280
    %v282 = vpop.xlane.xlu0 %281
    %v283 = vsel %vm114, %v267, 0.0
    %284 = vadd.xlane.f32.xlu0 %v283
    %v285 = vpop.xlane.xlu0 %284
    %v286 = vsel %vm114, %v269, 0.0
    %287 = vadd.xlane.f32.xlu0 %v286
    %v288 = vpop.xlane.xlu0 %287
    %v289 = vsel %vm114, %v271, 0.0
    %290 = vadd.xlane.f32.xlu0 %v289
    %v291 = vpop.xlane.xlu0 %290
    %v292 = vsel %vm114, %v273, 0.0
    %293 = vadd.xlane.f32.xlu0 %v292
    %v294 = vpop.xlane.xlu0 %293
    %v295 = vsel %vm114, %v275, 0.0
    %296 = vadd.xlane.f32.xlu0 %v295
    %v297 = vpop.xlane.xlu0 %296
    %v298 = vsel %vm114, %v277, 0.0
    %299 = vadd.xlane.f32.xlu0 %v298
    %v300 = vpop.xlane.xlu0 %299
    %v301 = vsel %vm114, %v279, 0.0
    %302 = vadd.xlane.f32.xlu0 %v301
    %v303 = vpop.xlane.xlu0 %302
    %v304 = vmul.f32 %v282, %v139
    %v305 = vmul.f32 %v285, %v139
    %v306 = vmul.f32 %v288, %v139
    %v307 = vmul.f32 %v291, %v139
    %v308 = vmul.f32 %v294, %v139
    %v309 = vmul.f32 %v297, %v139
    %v310 = vmul.f32 %v300, %v139
    %v311 = vmul.f32 %v303, %v139
    %v312 = vld [vmem:[%s1 + $0x3] sm:$0x1]
    %v313 = vlaneseq
    %v314 = vshrl.u32 %v313, 7
    %v315 = vsub.s32 0, %v314
    %v316 = vrot.slane %v312, %v315
    %v317 = vsub.f32 %v33, %v316
    %v318 = vsub.f32 %v34, %v316
    %v319 = vsub.f32 %v35, %v316
    %v320 = vsub.f32 %v36, %v316
    %v321 = vsub.f32 %v37, %v316
    %v322 = vsub.f32 %v38, %v316
    %v323 = vsub.f32 %v39, %v316
    %v324 = vsub.f32 %v40, %v316
    %v325 = vmul.f32 %v317, %v317
    %v326 = vmul.f32 %v318, %v318
    %v327 = vmul.f32 %v319, %v319
    %v328 = vmul.f32 %v320, %v320
    %v329 = vmul.f32 %v321, %v321
    %v330 = vmul.f32 %v322, %v322
    %v331 = vmul.f32 %v323, %v323
    %v332 = vmul.f32 %v324, %v324
    %v333 = vld [vmem:[%s2 + $0x3] sm:$0x1]
    %v334 = vlaneseq
    %v335 = vshrl.u32 %v334, 7
    %v336 = vsub.s32 0, %v335
    %v337 = vrot.slane %v333, %v336
    %v338 = vmul.f32 %v325, %v337
    %v339 = vmul.f32 %v326, %v337
    %v340 = vmul.f32 %v327, %v337
    %v341 = vmul.f32 %v328, %v337
    %v342 = vmul.f32 %v329, %v337
    %v343 = vmul.f32 %v330, %v337
    %v344 = vmul.f32 %v331, %v337
    %v345 = vmul.f32 %v332, %v337
    %v346 = vmul.f32 %v338, 1.442695
    %v347 = vpow.pop %v346
    %v348 = vmul.f32 %v339, 1.442695
    %v349 = vpow.pop %v348
    %v350 = vmul.f32 %v340, 1.442695
    %v351 = vpow.pop %v350
    %v352 = vmul.f32 %v341, 1.442695
    %v353 = vpow.pop %v352
    %v354 = vmul.f32 %v342, 1.442695
    %v355 = vpow.pop %v354
    %v356 = vmul.f32 %v343, 1.442695
    %v357 = vpow.pop %v356
    %v358 = vmul.f32 %v344, 1.442695
    %v359 = vpow.pop %v358
    %v360 = vmul.f32 %v345, 1.442695
    %v361 = vpow.pop %v360
    %v362 = vsel %vm114, %v347, 0.0
    %363 = vadd.xlane.f32.xlu0 %v362
    %v364 = vpop.xlane.xlu0 %363
    %v365 = vsel %vm114, %v349, 0.0
    %366 = vadd.xlane.f32.xlu0 %v365
    %v367 = vpop.xlane.xlu0 %366
    %v368 = vsel %vm114, %v351, 0.0
    %369 = vadd.xlane.f32.xlu0 %v368
    %v370 = vpop.xlane.xlu0 %369
    %v371 = vsel %vm114, %v353, 0.0
    %372 = vadd.xlane.f32.xlu0 %v371
    %v373 = vpop.xlane.xlu0 %372
    %v374 = vsel %vm114, %v355, 0.0
    %375 = vadd.xlane.f32.xlu0 %v374
    %v376 = vpop.xlane.xlu0 %375
    %v377 = vsel %vm114, %v357, 0.0
    %378 = vadd.xlane.f32.xlu0 %v377
    %v379 = vpop.xlane.xlu0 %378
    %v380 = vsel %vm114, %v359, 0.0
    %381 = vadd.xlane.f32.xlu0 %v380
    %v382 = vpop.xlane.xlu0 %381
    %v383 = vsel %vm114, %v361, 0.0
    %384 = vadd.xlane.f32.xlu0 %v383
    %v385 = vpop.xlane.xlu0 %384
    %v386 = vmul.f32 %v364, %v139
    %v387 = vmul.f32 %v367, %v139
    %v388 = vmul.f32 %v370, %v139
    %v389 = vmul.f32 %v373, %v139
    %v390 = vmul.f32 %v376, %v139
    %v391 = vmul.f32 %v379, %v139
    %v392 = vmul.f32 %v382, %v139
    %v393 = vmul.f32 %v385, %v139
    %v394 = vld [vmem:[%s1 + $0x4] sm:$0x1]
    %v395 = vlaneseq
    %v396 = vshrl.u32 %v395, 7
    %v397 = vsub.s32 0, %v396
    %v398 = vrot.slane %v394, %v397
    %v399 = vsub.f32 %v33, %v398
    %v400 = vsub.f32 %v34, %v398
    %v401 = vsub.f32 %v35, %v398
    %v402 = vsub.f32 %v36, %v398
    %v403 = vsub.f32 %v37, %v398
    %v404 = vsub.f32 %v38, %v398
    %v405 = vsub.f32 %v39, %v398
    %v406 = vsub.f32 %v40, %v398
    %v407 = vmul.f32 %v399, %v399
    %v408 = vmul.f32 %v400, %v400
    %v409 = vmul.f32 %v401, %v401
    %v410 = vmul.f32 %v402, %v402
    %v411 = vmul.f32 %v403, %v403
    %v412 = vmul.f32 %v404, %v404
    %v413 = vmul.f32 %v405, %v405
    %v414 = vmul.f32 %v406, %v406
    %v415 = vld [vmem:[%s2 + $0x4] sm:$0x1]
    %v416 = vlaneseq
    %v417 = vshrl.u32 %v416, 7
    %v418 = vsub.s32 0, %v417
    %v419 = vrot.slane %v415, %v418
    %v420 = vmul.f32 %v407, %v419
    %v421 = vmul.f32 %v408, %v419
    %v422 = vmul.f32 %v409, %v419
    %v423 = vmul.f32 %v410, %v419
    %v424 = vmul.f32 %v411, %v419
    %v425 = vmul.f32 %v412, %v419
    %v426 = vmul.f32 %v413, %v419
    %v427 = vmul.f32 %v414, %v419
    %v428 = vmul.f32 %v420, 1.442695
    %v429 = vpow.pop %v428
    %v430 = vmul.f32 %v421, 1.442695
    %v431 = vpow.pop %v430
    %v432 = vmul.f32 %v422, 1.442695
    %v433 = vpow.pop %v432
    %v434 = vmul.f32 %v423, 1.442695
    %v435 = vpow.pop %v434
    %v436 = vmul.f32 %v424, 1.442695
    %v437 = vpow.pop %v436
    %v438 = vmul.f32 %v425, 1.442695
    %v439 = vpow.pop %v438
    %v440 = vmul.f32 %v426, 1.442695
    %v441 = vpow.pop %v440
    %v442 = vmul.f32 %v427, 1.442695
    %v443 = vpow.pop %v442
    %v444 = vsel %vm114, %v429, 0.0
    %445 = vadd.xlane.f32.xlu0 %v444
    %v446 = vpop.xlane.xlu0 %445
    %v447 = vsel %vm114, %v431, 0.0
    %448 = vadd.xlane.f32.xlu0 %v447
    %v449 = vpop.xlane.xlu0 %448
    %v450 = vsel %vm114, %v433, 0.0
    %451 = vadd.xlane.f32.xlu0 %v450
    %v452 = vpop.xlane.xlu0 %451
    %v453 = vsel %vm114, %v435, 0.0
    %454 = vadd.xlane.f32.xlu0 %v453
    %v455 = vpop.xlane.xlu0 %454
    %v456 = vsel %vm114, %v437, 0.0
    %457 = vadd.xlane.f32.xlu0 %v456
    %v458 = vpop.xlane.xlu0 %457
    %v459 = vsel %vm114, %v439, 0.0
    %460 = vadd.xlane.f32.xlu0 %v459
    %v461 = vpop.xlane.xlu0 %460
    %v462 = vsel %vm114, %v441, 0.0
    %463 = vadd.xlane.f32.xlu0 %v462
    %v464 = vpop.xlane.xlu0 %463
    %v465 = vsel %vm114, %v443, 0.0
    %466 = vadd.xlane.f32.xlu0 %v465
    %v467 = vpop.xlane.xlu0 %466
    %v468 = vmul.f32 %v446, %v139
    %v469 = vmul.f32 %v449, %v139
    %v470 = vmul.f32 %v452, %v139
    %v471 = vmul.f32 %v455, %v139
    %v472 = vmul.f32 %v458, %v139
    %v473 = vmul.f32 %v461, %v139
    %v474 = vmul.f32 %v464, %v139
    %v475 = vmul.f32 %v467, %v139
    %v476 = vld [vmem:[%s1 + $0x5] sm:$0x1]
    %v477 = vlaneseq
    %v478 = vshrl.u32 %v477, 7
    %v479 = vsub.s32 0, %v478
    %v480 = vrot.slane %v476, %v479
    %v481 = vsub.f32 %v33, %v480
    %v482 = vsub.f32 %v34, %v480
    %v483 = vsub.f32 %v35, %v480
    %v484 = vsub.f32 %v36, %v480
    %v485 = vsub.f32 %v37, %v480
    %v486 = vsub.f32 %v38, %v480
    %v487 = vsub.f32 %v39, %v480
    %v488 = vsub.f32 %v40, %v480
    %v489 = vmul.f32 %v481, %v481
    %v490 = vmul.f32 %v482, %v482
    %v491 = vmul.f32 %v483, %v483
    %v492 = vmul.f32 %v484, %v484
    %v493 = vmul.f32 %v485, %v485
    %v494 = vmul.f32 %v486, %v486
    %v495 = vmul.f32 %v487, %v487
    %v496 = vmul.f32 %v488, %v488
    %v497 = vld [vmem:[%s2 + $0x5] sm:$0x1]
    %v498 = vlaneseq
    %v499 = vshrl.u32 %v498, 7
    %v500 = vsub.s32 0, %v499
    %v501 = vrot.slane %v497, %v500
    %v502 = vmul.f32 %v489, %v501
    %v503 = vmul.f32 %v490, %v501
    %v504 = vmul.f32 %v491, %v501
    %v505 = vmul.f32 %v492, %v501
    %v506 = vmul.f32 %v493, %v501
    %v507 = vmul.f32 %v494, %v501
    %v508 = vmul.f32 %v495, %v501
    %v509 = vmul.f32 %v496, %v501
    %v510 = vmul.f32 %v502, 1.442695
    %v511 = vpow.pop %v510
    %v512 = vmul.f32 %v503, 1.442695
    %v513 = vpow.pop %v512
    %v514 = vmul.f32 %v504, 1.442695
    %v515 = vpow.pop %v514
    %v516 = vmul.f32 %v505, 1.442695
    %v517 = vpow.pop %v516
    %v518 = vmul.f32 %v506, 1.442695
    %v519 = vpow.pop %v518
    %v520 = vmul.f32 %v507, 1.442695
    %v521 = vpow.pop %v520
    %v522 = vmul.f32 %v508, 1.442695
    %v523 = vpow.pop %v522
    %v524 = vmul.f32 %v509, 1.442695
    %v525 = vpow.pop %v524
    %v526 = vsel %vm114, %v511, 0.0
    %527 = vadd.xlane.f32.xlu0 %v526
    %v528 = vpop.xlane.xlu0 %527
    %v529 = vsel %vm114, %v513, 0.0
    %530 = vadd.xlane.f32.xlu0 %v529
    %v531 = vpop.xlane.xlu0 %530
    %v532 = vsel %vm114, %v515, 0.0
    %533 = vadd.xlane.f32.xlu0 %v532
    %v534 = vpop.xlane.xlu0 %533
    %v535 = vsel %vm114, %v517, 0.0
    %536 = vadd.xlane.f32.xlu0 %v535
    %v537 = vpop.xlane.xlu0 %536
    %v538 = vsel %vm114, %v519, 0.0
    %539 = vadd.xlane.f32.xlu0 %v538
    %v540 = vpop.xlane.xlu0 %539
    %v541 = vsel %vm114, %v521, 0.0
    %542 = vadd.xlane.f32.xlu0 %v541
    %v543 = vpop.xlane.xlu0 %542
    %v544 = vsel %vm114, %v523, 0.0
    %545 = vadd.xlane.f32.xlu0 %v544
    %v546 = vpop.xlane.xlu0 %545
    %v547 = vsel %vm114, %v525, 0.0
    %548 = vadd.xlane.f32.xlu0 %v547
    %v549 = vpop.xlane.xlu0 %548
    %v550 = vmul.f32 %v528, %v139
    %v551 = vmul.f32 %v531, %v139
    %v552 = vmul.f32 %v534, %v139
    %v553 = vmul.f32 %v537, %v139
    %v554 = vmul.f32 %v540, %v139
    %v555 = vmul.f32 %v543, %v139
    %v556 = vmul.f32 %v546, %v139
    %v557 = vmul.f32 %v549, %v139
    %v558 = vld [vmem:[%s1 + $0x6] sm:$0x1]
    %v559 = vlaneseq
    %v560 = vshrl.u32 %v559, 7
    %v561 = vsub.s32 0, %v560
    %v562 = vrot.slane %v558, %v561
    %v563 = vsub.f32 %v33, %v562
    %v564 = vsub.f32 %v34, %v562
    %v565 = vsub.f32 %v35, %v562
    %v566 = vsub.f32 %v36, %v562
    %v567 = vsub.f32 %v37, %v562
    %v568 = vsub.f32 %v38, %v562
    %v569 = vsub.f32 %v39, %v562
    %v570 = vsub.f32 %v40, %v562
    %v571 = vmul.f32 %v563, %v563
    %v572 = vmul.f32 %v564, %v564
    %v573 = vmul.f32 %v565, %v565
    %v574 = vmul.f32 %v566, %v566
    %v575 = vmul.f32 %v567, %v567
    %v576 = vmul.f32 %v568, %v568
    %v577 = vmul.f32 %v569, %v569
    %v578 = vmul.f32 %v570, %v570
    %v579 = vld [vmem:[%s2 + $0x6] sm:$0x1]
    %v580 = vlaneseq
    %v581 = vshrl.u32 %v580, 7
    %v582 = vsub.s32 0, %v581
    %v583 = vrot.slane %v579, %v582
    %v584 = vmul.f32 %v571, %v583
    %v585 = vmul.f32 %v572, %v583
    %v586 = vmul.f32 %v573, %v583
    %v587 = vmul.f32 %v574, %v583
    %v588 = vmul.f32 %v575, %v583
    %v589 = vmul.f32 %v576, %v583
    %v590 = vmul.f32 %v577, %v583
    %v591 = vmul.f32 %v578, %v583
    %v592 = vmul.f32 %v584, 1.442695
    %v593 = vpow.pop %v592
    %v594 = vmul.f32 %v585, 1.442695
    %v595 = vpow.pop %v594
    %v596 = vmul.f32 %v586, 1.442695
    %v597 = vpow.pop %v596
    %v598 = vmul.f32 %v587, 1.442695
    %v599 = vpow.pop %v598
    %v600 = vmul.f32 %v588, 1.442695
    %v601 = vpow.pop %v600
    %v602 = vmul.f32 %v589, 1.442695
    %v603 = vpow.pop %v602
    %v604 = vmul.f32 %v590, 1.442695
    %v605 = vpow.pop %v604
    %v606 = vmul.f32 %v591, 1.442695
    %v607 = vpow.pop %v606
    %v608 = vsel %vm114, %v593, 0.0
    %609 = vadd.xlane.f32.xlu0 %v608
    %v610 = vpop.xlane.xlu0 %609
    %v611 = vsel %vm114, %v595, 0.0
    %612 = vadd.xlane.f32.xlu0 %v611
    %v613 = vpop.xlane.xlu0 %612
    %v614 = vsel %vm114, %v597, 0.0
    %615 = vadd.xlane.f32.xlu0 %v614
    %v616 = vpop.xlane.xlu0 %615
    %v617 = vsel %vm114, %v599, 0.0
    %618 = vadd.xlane.f32.xlu0 %v617
    %v619 = vpop.xlane.xlu0 %618
    %v620 = vsel %vm114, %v601, 0.0
    %621 = vadd.xlane.f32.xlu0 %v620
    %v622 = vpop.xlane.xlu0 %621
    %v623 = vsel %vm114, %v603, 0.0
    %624 = vadd.xlane.f32.xlu0 %v623
    %v625 = vpop.xlane.xlu0 %624
    %v626 = vsel %vm114, %v605, 0.0
    %627 = vadd.xlane.f32.xlu0 %v626
    %v628 = vpop.xlane.xlu0 %627
    %v629 = vsel %vm114, %v607, 0.0
    %630 = vadd.xlane.f32.xlu0 %v629
    %v631 = vpop.xlane.xlu0 %630
    %v632 = vmul.f32 %v610, %v139
    %v633 = vmul.f32 %v613, %v139
    %v634 = vmul.f32 %v616, %v139
    %v635 = vmul.f32 %v619, %v139
    %v636 = vmul.f32 %v622, %v139
    %v637 = vmul.f32 %v625, %v139
    %v638 = vmul.f32 %v628, %v139
    %v639 = vmul.f32 %v631, %v139
    %v640 = vld [vmem:[%s1 + $0x7] sm:$0x1]
    %v641 = vlaneseq
    %v642 = vshrl.u32 %v641, 7
    %v643 = vsub.s32 0, %v642
    %v644 = vrot.slane %v640, %v643
    %v645 = vsub.f32 %v33, %v644
    %v646 = vsub.f32 %v34, %v644
    %v647 = vsub.f32 %v35, %v644
    %v648 = vsub.f32 %v36, %v644
    %v649 = vsub.f32 %v37, %v644
    %v650 = vsub.f32 %v38, %v644
    %v651 = vsub.f32 %v39, %v644
    %v652 = vsub.f32 %v40, %v644
    %v653 = vmul.f32 %v645, %v645
    %v654 = vmul.f32 %v646, %v646
    %v655 = vmul.f32 %v647, %v647
    %v656 = vmul.f32 %v648, %v648
    %v657 = vmul.f32 %v649, %v649
    %v658 = vmul.f32 %v650, %v650
    %v659 = vmul.f32 %v651, %v651
    %v660 = vmul.f32 %v652, %v652
    %v661 = vld [vmem:[%s2 + $0x7] sm:$0x1]
    %v662 = vlaneseq
    %v663 = vshrl.u32 %v662, 7
    %v664 = vsub.s32 0, %v663
    %v665 = vrot.slane %v661, %v664
    %v666 = vmul.f32 %v653, %v665
    %v667 = vmul.f32 %v654, %v665
    %v668 = vmul.f32 %v655, %v665
    %v669 = vmul.f32 %v656, %v665
    %v670 = vmul.f32 %v657, %v665
    %v671 = vmul.f32 %v658, %v665
    %v672 = vmul.f32 %v659, %v665
    %v673 = vmul.f32 %v660, %v665
    %v674 = vmul.f32 %v666, 1.442695
    %v675 = vpow.pop %v674
    %v676 = vmul.f32 %v667, 1.442695
    %v677 = vpow.pop %v676
    %v678 = vmul.f32 %v668, 1.442695
    %v679 = vpow.pop %v678
    %v680 = vmul.f32 %v669, 1.442695
    %v681 = vpow.pop %v680
    %v682 = vmul.f32 %v670, 1.442695
    %v683 = vpow.pop %v682
    %v684 = vmul.f32 %v671, 1.442695
    %v685 = vpow.pop %v684
    %v686 = vmul.f32 %v672, 1.442695
    %v687 = vpow.pop %v686
    %v688 = vmul.f32 %v673, 1.442695
    %v689 = vpow.pop %v688
    %v690 = vsel %vm114, %v675, 0.0
    %691 = vadd.xlane.f32.xlu0 %v690
    %v692 = vpop.xlane.xlu0 %691
    %v693 = vsel %vm114, %v677, 0.0
    %694 = vadd.xlane.f32.xlu0 %v693
    %v695 = vpop.xlane.xlu0 %694
    %v696 = vsel %vm114, %v679, 0.0
    %697 = vadd.xlane.f32.xlu0 %v696
    %v698 = vpop.xlane.xlu0 %697
    %v699 = vsel %vm114, %v681, 0.0
    %700 = vadd.xlane.f32.xlu0 %v699
    %v701 = vpop.xlane.xlu0 %700
    %v702 = vsel %vm114, %v683, 0.0
    %703 = vadd.xlane.f32.xlu0 %v702
    %v704 = vpop.xlane.xlu0 %703
    %v705 = vsel %vm114, %v685, 0.0
    %706 = vadd.xlane.f32.xlu0 %v705
    %v707 = vpop.xlane.xlu0 %706
    %v708 = vsel %vm114, %v687, 0.0
    %709 = vadd.xlane.f32.xlu0 %v708
    %v710 = vpop.xlane.xlu0 %709
    %v711 = vsel %vm114, %v689, 0.0
    %712 = vadd.xlane.f32.xlu0 %v711
    %v713 = vpop.xlane.xlu0 %712
    %v714 = vmul.f32 %v692, %v139
    %v715 = vmul.f32 %v695, %v139
    %v716 = vmul.f32 %v698, %v139
    %v717 = vmul.f32 %v701, %v139
    %v718 = vmul.f32 %v704, %v139
    %v719 = vmul.f32 %v707, %v139
    %v720 = vmul.f32 %v710, %v139
    %v721 = vmul.f32 %v713, %v139
    %vm722 = vcmask 7168
    %v723 = vsel %vm722, %v140, %v222
    %v724 = vsel %vm722, %v141, %v223
    %v725 = vsel %vm722, %v142, %v224
    %v726 = vsel %vm722, %v143, %v225
    %v727 = vsel %vm722, %v144, %v226
    %v728 = vsel %vm722, %v145, %v227
    %v729 = vsel %vm722, %v146, %v228
    %v730 = vsel %vm722, %v147, %v229
    %vm731 = vcmask 15360
    %v732 = vsel %vm731, %v723, %v304
    %v733 = vsel %vm731, %v724, %v305
    %v734 = vsel %vm731, %v725, %v306
    %v735 = vsel %vm731, %v726, %v307
    %v736 = vsel %vm731, %v727, %v308
    %v737 = vsel %vm731, %v728, %v309
    %v738 = vsel %vm731, %v729, %v310
    %v739 = vsel %vm731, %v730, %v311
    %vm740 = vcmask 23552
    %v741 = vsel %vm740, %v732, %v386
    %v742 = vsel %vm740, %v733, %v387
    %v743 = vsel %vm740, %v734, %v388
    %v744 = vsel %vm740, %v735, %v389
    %v745 = vsel %vm740, %v736, %v390
    %v746 = vsel %vm740, %v737, %v391
    %v747 = vsel %vm740, %v738, %v392
    %v748 = vsel %vm740, %v739, %v393
    %vm749 = vcmask 31744
    %v750 = vsel %vm749, %v741, %v468
    %v751 = vsel %vm749, %v742, %v469
    %v752 = vsel %vm749, %v743, %v470
    %v753 = vsel %vm749, %v744, %v471
    %v754 = vsel %vm749, %v745, %v472
    %v755 = vsel %vm749, %v746, %v473
    %v756 = vsel %vm749, %v747, %v474
    %v757 = vsel %vm749, %v748, %v475
    %vm758 = vcmask 39936
    %v759 = vsel %vm758, %v750, %v550
    %v760 = vsel %vm758, %v751, %v551
    %v761 = vsel %vm758, %v752, %v552
    %v762 = vsel %vm758, %v753, %v553
    %v763 = vsel %vm758, %v754, %v554
    %v764 = vsel %vm758, %v755, %v555
    %v765 = vsel %vm758, %v756, %v556
    %v766 = vsel %vm758, %v757, %v557
    %vm767 = vcmask 48128
    %v768 = vsel %vm767, %v759, %v632
    %v769 = vsel %vm767, %v760, %v633
    %v770 = vsel %vm767, %v761, %v634
    %v771 = vsel %vm767, %v762, %v635
    %v772 = vsel %vm767, %v763, %v636
    %v773 = vsel %vm767, %v764, %v637
    %v774 = vsel %vm767, %v765, %v638
    %v775 = vsel %vm767, %v766, %v639
    %vm776 = vcmask 56320
    %v777 = vsel %vm776, %v768, %v714
    %v778 = vsel %vm776, %v769, %v715
    %v779 = vsel %vm776, %v770, %v716
    %v780 = vsel %vm776, %v771, %v717
    %v781 = vsel %vm776, %v772, %v718
    %v782 = vsel %vm776, %v773, %v719
    %v783 = vsel %vm776, %v774, %v720
    %v784 = vsel %vm776, %v775, %v721
    %v785 = vld [vmem:[%s3] sm:$0x1]
    %v786 = vld [vmem:[%s3 + $0x1] sm:$0x1]
    %v787 = vld [vmem:[%s3 + $0x2] sm:$0x1]
    %v788 = vld [vmem:[%s3 + $0x3] sm:$0x1]
    %v789 = vld [vmem:[%s3 + $0x4] sm:$0x1]
    %v790 = vld [vmem:[%s3 + $0x5] sm:$0x1]
    %v791 = vld [vmem:[%s3 + $0x6] sm:$0x1]
    %v792 = vlaneseq
    %v793 = vshrl.u32 %v792, 7
    %v794 = vsub.s32 0, %v793
    %v795 = vrot.slane %v785, %v794
    %v796 = vmul.f32 %v777, %v795
    %v797 = vmul.f32 %v778, %v795
    %v798 = vmul.f32 %v779, %v795
    %v799 = vmul.f32 %v780, %v795
    %v800 = vmul.f32 %v781, %v795
    %v801 = vmul.f32 %v782, %v795
    %v802 = vmul.f32 %v783, %v795
    %v803 = vmul.f32 %v784, %v795
    %v804 = vlaneseq
    %v805 = vshrl.u32 %v804, 7
    %v806 = vsub.s32 0, %v805
    %v807 = vrot.slane %v786, %v806
    %v808 = vadd.f32 %v796, %v807
    %v809 = vadd.f32 %v797, %v807
    %v810 = vadd.f32 %v798, %v807
    %v811 = vadd.f32 %v799, %v807
    %v812 = vadd.f32 %v800, %v807
    %v813 = vadd.f32 %v801, %v807
    %v814 = vadd.f32 %v802, %v807
    %v815 = vadd.f32 %v803, %v807
    %v816 = vsel %vm55, 1, 0
    %v817 = vsel %vm56, 1, 0
    %v818 = vsel %vm57, 1, 0
    %v819 = vsel %vm58, 1, 0
    %v820 = vsel %vm59, 1, 0
    %v821 = vsel %vm60, 1, 0
    %v822 = vsel %vm61, 1, 0
    %v823 = vsel %vm62, 1, 0
    %vm824 = vcmp.eq.s32.totalorder %v816, 1
    %vm825 = vcmp.eq.s32.totalorder %v817, 1
    %vm826 = vcmp.eq.s32.totalorder %v818, 1
    %vm827 = vcmp.eq.s32.totalorder %v819, 1
    %vm828 = vcmp.eq.s32.totalorder %v820, 1
    %vm829 = vcmp.eq.s32.totalorder %v821, 1
    %vm830 = vcmp.eq.s32.totalorder %v822, 1
    %vm831 = vcmp.eq.s32.totalorder %v823, 1
    %v832 = vsel %vm824, %v808, 0.0
    %v833 = vsel %vm825, %v809, 0.0
    %v834 = vsel %vm826, %v810, 0.0
    %v835 = vsel %vm827, %v811, 0.0
    %v836 = vsel %vm828, %v812, 0.0
    %v837 = vsel %vm829, %v813, 0.0
    %v838 = vsel %vm830, %v814, 0.0
    %v839 = vsel %vm831, %v815, 0.0
    %vm840 = vcmask 64512
    %v841 = vsel %vm840, %v832, 0.0
    %v842 = vsel %vm840, %v833, 0.0
    %v843 = vadd.f32 %v841, %v842
    %v844 = vsel %vm840, %v834, 0.0
    %v845 = vadd.f32 %v843, %v844
    %v846 = vsel %vm840, %v835, 0.0
    %v847 = vadd.f32 %v845, %v846
    %v848 = vsel %vm840, %v836, 0.0
    %v849 = vadd.f32 %v847, %v848
    %v850 = vsel %vm840, %v837, 0.0
    %v851 = vadd.f32 %v849, %v850
    %v852 = vsel %vm840, %v838, 0.0
    %v853 = vadd.f32 %v851, %v852
    %v854 = vsel %vm840, %v839, 0.0
    %v855 = vadd.f32 %v853, %v854
    %v856 = vrot.slane %v855, 4
    %v857 = vadd.f32 %v855, %v856
    %v858 = vrot.slane %v857, 2
    %v859 = vadd.f32 %v857, %v858
    %v860 = vrot.slane %v859, 1
    %v861 = vadd.f32 %v859, %v860
    %v862 = vstv %s63
    %v863 = vrcp.pop %v862
    %v864 = vmul.f32 %v861, %v863
    %v865 = vsub.f32 %v808, %v864
    %v866 = vsub.f32 %v809, %v864
    %v867 = vsub.f32 %v810, %v864
    %v868 = vsub.f32 %v811, %v864
    %v869 = vsub.f32 %v812, %v864
    %v870 = vsub.f32 %v813, %v864
    %v871 = vsub.f32 %v814, %v864
    %v872 = vsub.f32 %v815, %v864
    %v873 = vsel %vm824, %v865, 0.0
    %v874 = vsel %vm825, %v866, 0.0
    %v875 = vsel %vm826, %v867, 0.0
    %v876 = vsel %vm827, %v868, 0.0
    %v877 = vsel %vm828, %v869, 0.0
    %v878 = vsel %vm829, %v870, 0.0
    %v879 = vsel %vm830, %v871, 0.0
    %v880 = vsel %vm831, %v872, 0.0
    %v881 = vmul.f32 %v873, %v873
    %v882 = vmul.f32 %v874, %v874
    %v883 = vmul.f32 %v875, %v875
    %v884 = vmul.f32 %v876, %v876
    %v885 = vmul.f32 %v877, %v877
    %v886 = vmul.f32 %v878, %v878
    %v887 = vmul.f32 %v879, %v879
    %v888 = vmul.f32 %v880, %v880
    %v889 = vsel %vm840, %v881, 0.0
    %v890 = vsel %vm840, %v882, 0.0
    %v891 = vadd.f32 %v889, %v890
    %v892 = vsel %vm840, %v883, 0.0
    %v893 = vadd.f32 %v891, %v892
    %v894 = vsel %vm840, %v884, 0.0
    %v895 = vadd.f32 %v893, %v894
    %v896 = vsel %vm840, %v885, 0.0
    %v897 = vadd.f32 %v895, %v896
    %v898 = vsel %vm840, %v886, 0.0
    %v899 = vadd.f32 %v897, %v898
    %v900 = vsel %vm840, %v887, 0.0
    %v901 = vadd.f32 %v899, %v900
    %v902 = vsel %vm840, %v888, 0.0
    %v903 = vadd.f32 %v901, %v902
    %v904 = vrot.slane %v903, 4
    %v905 = vadd.f32 %v903, %v904
    %v906 = vrot.slane %v905, 2
    %v907 = vadd.f32 %v905, %v906
    %v908 = vrot.slane %v907, 1
    %v909 = vadd.f32 %v907, %v908
    %v910 = vmul.f32 %v909, %v863
    %v911 = vadd.f32 %v910, 1e-05
    %v912 = vrsqrt.pop %v911
    %v913 = vmul.f32 %v865, %v912
    %v914 = vmul.f32 %v866, %v912
    %v915 = vmul.f32 %v867, %v912
    %v916 = vmul.f32 %v868, %v912
    %v917 = vmul.f32 %v869, %v912
    %v918 = vmul.f32 %v870, %v912
    %v919 = vmul.f32 %v871, %v912
    %v920 = vmul.f32 %v872, %v912
    %v921 = vlaneseq
    %v922 = vshrl.u32 %v921, 7
    %v923 = vsub.s32 0, %v922
    %v924 = vrot.slane %v787, %v923
    %v925 = vmul.f32 %v913, %v924
    %v926 = vmul.f32 %v914, %v924
    %v927 = vmul.f32 %v915, %v924
    %v928 = vmul.f32 %v916, %v924
    %v929 = vmul.f32 %v917, %v924
    %v930 = vmul.f32 %v918, %v924
    %v931 = vmul.f32 %v919, %v924
    %v932 = vmul.f32 %v920, %v924
    %v933 = vlaneseq
    %v934 = vshrl.u32 %v933, 7
    %v935 = vsub.s32 0, %v934
    %v936 = vrot.slane %v788, %v935
    %v937 = vadd.f32 %v925, %v936
    %v938 = vadd.f32 %v926, %v936
    %v939 = vadd.f32 %v927, %v936
    %v940 = vadd.f32 %v928, %v936
    %v941 = vadd.f32 %v929, %v936
    %v942 = vadd.f32 %v930, %v936
    %v943 = vadd.f32 %v931, %v936
    %v944 = vadd.f32 %v932, %v936
    %v945 = vsel %vm824, %v937, 0.0
    %v946 = vsel %vm825, %v938, 0.0
    %v947 = vsel %vm826, %v939, 0.0
    %v948 = vsel %vm827, %v940, 0.0
    %v949 = vsel %vm828, %v941, 0.0
    %v950 = vsel %vm829, %v942, 0.0
    %v951 = vsel %vm830, %v943, 0.0
    %v952 = vsel %vm831, %v944, 0.0
    %v953 = vsel %vm840, %v945, 0.0
    %v954 = vsel %vm840, %v946, 0.0
    %v955 = vadd.f32 %v953, %v954
    %v956 = vsel %vm840, %v947, 0.0
    %v957 = vadd.f32 %v955, %v956
    %v958 = vsel %vm840, %v948, 0.0
    %v959 = vadd.f32 %v957, %v958
    %v960 = vsel %vm840, %v949, 0.0
    %v961 = vadd.f32 %v959, %v960
    %v962 = vsel %vm840, %v950, 0.0
    %v963 = vadd.f32 %v961, %v962
    %v964 = vsel %vm840, %v951, 0.0
    %v965 = vadd.f32 %v963, %v964
    %v966 = vsel %vm840, %v952, 0.0
    %v967 = vadd.f32 %v965, %v966
    %v968 = vrot.slane %v967, 4
    %v969 = vadd.f32 %v967, %v968
    %v970 = vrot.slane %v969, 2
    %v971 = vadd.f32 %v969, %v970
    %v972 = vrot.slane %v971, 1
    %v973 = vadd.f32 %v971, %v972
    %v974 = vmul.f32 %v973, %v863
    %v975 = vsub.f32 %v937, %v974
    %v976 = vsub.f32 %v938, %v974
    %v977 = vsub.f32 %v939, %v974
    %v978 = vsub.f32 %v940, %v974
    %v979 = vsub.f32 %v941, %v974
    %v980 = vsub.f32 %v942, %v974
    %v981 = vsub.f32 %v943, %v974
    %v982 = vsub.f32 %v944, %v974
    %v983 = vsel %vm824, %v975, 0.0
    %v984 = vsel %vm825, %v976, 0.0
    %v985 = vsel %vm826, %v977, 0.0
    %v986 = vsel %vm827, %v978, 0.0
    %v987 = vsel %vm828, %v979, 0.0
    %v988 = vsel %vm829, %v980, 0.0
    %v989 = vsel %vm830, %v981, 0.0
    %v990 = vsel %vm831, %v982, 0.0
    %v991 = vmul.f32 %v983, %v983
    %v992 = vmul.f32 %v984, %v984
    %v993 = vmul.f32 %v985, %v985
    %v994 = vmul.f32 %v986, %v986
    %v995 = vmul.f32 %v987, %v987
    %v996 = vmul.f32 %v988, %v988
    %v997 = vmul.f32 %v989, %v989
    %v998 = vmul.f32 %v990, %v990
    %v999 = vsel %vm840, %v991, 0.0
    %v1000 = vsel %vm840, %v992, 0.0
    %v1001 = vadd.f32 %v999, %v1000
    %v1002 = vsel %vm840, %v993, 0.0
    %v1003 = vadd.f32 %v1001, %v1002
    %v1004 = vsel %vm840, %v994, 0.0
    %v1005 = vadd.f32 %v1003, %v1004
    %v1006 = vsel %vm840, %v995, 0.0
    %v1007 = vadd.f32 %v1005, %v1006
    %v1008 = vsel %vm840, %v996, 0.0
    %v1009 = vadd.f32 %v1007, %v1008
    %v1010 = vsel %vm840, %v997, 0.0
    %v1011 = vadd.f32 %v1009, %v1010
    %v1012 = vsel %vm840, %v998, 0.0
    %v1013 = vadd.f32 %v1011, %v1012
    %v1014 = vrot.slane %v1013, 4
    %v1015 = vadd.f32 %v1013, %v1014
    %v1016 = vrot.slane %v1015, 2
    %v1017 = vadd.f32 %v1015, %v1016
    %v1018 = vrot.slane %v1017, 1
    %v1019 = vadd.f32 %v1017, %v1018
    %v1020 = vmul.f32 %v1019, %v863
    %v1021 = vadd.f32 %v1020, 1e-05
    %v1022 = vrsqrt.pop %v1021
    %v1023 = vmul.f32 %v975, %v1022
    %v1024 = vmul.f32 %v976, %v1022
    %v1025 = vmul.f32 %v977, %v1022
    %v1026 = vmul.f32 %v978, %v1022
    %v1027 = vmul.f32 %v979, %v1022
    %v1028 = vmul.f32 %v980, %v1022
    %v1029 = vmul.f32 %v981, %v1022
    %v1030 = vmul.f32 %v982, %v1022
    %v1031 = vlaneseq
    %v1032 = vshrl.u32 %v1031, 7
    %v1033 = vsub.s32 0, %v1032
    %v1034 = vrot.slane %v789, %v1033
    %v1035 = vmul.f32 %v1023, %v1034
    %v1036 = vmul.f32 %v1024, %v1034
    %v1037 = vmul.f32 %v1025, %v1034
    %v1038 = vmul.f32 %v1026, %v1034
    %v1039 = vmul.f32 %v1027, %v1034
    %v1040 = vmul.f32 %v1028, %v1034
    %v1041 = vmul.f32 %v1029, %v1034
    %v1042 = vmul.f32 %v1030, %v1034
    %v1043 = vlaneseq
    %v1044 = vshrl.u32 %v1043, 7
    %v1045 = vsub.s32 0, %v1044
    %v1046 = vrot.slane %v790, %v1045
    %v1047 = vadd.f32 %v1035, %v1046
    %v1048 = vadd.f32 %v1036, %v1046
    %v1049 = vadd.f32 %v1037, %v1046
    %v1050 = vadd.f32 %v1038, %v1046
    %v1051 = vadd.f32 %v1039, %v1046
    %v1052 = vadd.f32 %v1040, %v1046
    %v1053 = vadd.f32 %v1041, %v1046
    %v1054 = vadd.f32 %v1042, %v1046
    %v1055 = vlaneseq
    %v1056 = vshrl.u32 %v1055, 7
    %v1057 = vsub.s32 0, %v1056
    %v1058 = vrot.slane %v791, %v1057
    %v1059 = vmul.f32 %v1047, %v1058
    %v1060 = vmul.f32 %v1048, %v1058
    %v1061 = vmul.f32 %v1049, %v1058
    %v1062 = vmul.f32 %v1050, %v1058
    %v1063 = vmul.f32 %v1051, %v1058
    %v1064 = vmul.f32 %v1052, %v1058
    %v1065 = vmul.f32 %v1053, %v1058
    %v1066 = vmul.f32 %v1054, %v1058
    %v1067 = vsel %vm840, %v1059, 0.0
    %1068 = vadd.xlane.f32.xlu0 %v1067
    %v1069 = vpop.xlane.xlu0 %1068
    %v1070 = vsel %vm840, %v1060, 0.0
    %1071 = vadd.xlane.f32.xlu0 %v1070
    %v1072 = vpop.xlane.xlu0 %1071
    %v1073 = vsel %vm840, %v1061, 0.0
    %1074 = vadd.xlane.f32.xlu0 %v1073
    %v1075 = vpop.xlane.xlu0 %1074
    %v1076 = vsel %vm840, %v1062, 0.0
    %1077 = vadd.xlane.f32.xlu0 %v1076
    %v1078 = vpop.xlane.xlu0 %1077
    %v1079 = vsel %vm840, %v1063, 0.0
    %1080 = vadd.xlane.f32.xlu0 %v1079
    %v1081 = vpop.xlane.xlu0 %1080
    %v1082 = vsel %vm840, %v1064, 0.0
    %1083 = vadd.xlane.f32.xlu0 %v1082
    %v1084 = vpop.xlane.xlu0 %1083
    %v1085 = vsel %vm840, %v1065, 0.0
    %1086 = vadd.xlane.f32.xlu0 %v1085
    %v1087 = vpop.xlane.xlu0 %1086
    %v1088 = vsel %vm840, %v1066, 0.0
    %1089 = vadd.xlane.f32.xlu0 %v1088
    %v1090 = vpop.xlane.xlu0 %1089
    %s1091 = sld [smem:[#allocation2]]
    %v1092 = vstv %s1091
    %v1093 = vadd.f32 %v1069, %v1092
    %v1094 = vadd.f32 %v1072, %v1092
    %v1095 = vadd.f32 %v1075, %v1092
    %v1096 = vadd.f32 %v1078, %v1092
    %v1097 = vadd.f32 %v1081, %v1092
    %v1098 = vadd.f32 %v1084, %v1092
    %v1099 = vadd.f32 %v1087, %v1092
    %v1100 = vadd.f32 %v1090, %v1092
    %v1101 = vxor.u32 %v1093, 2147483648
    %v1102 = vxor.u32 %v1094, 2147483648
    %v1103 = vxor.u32 %v1095, 2147483648
    %v1104 = vxor.u32 %v1096, 2147483648
    %v1105 = vxor.u32 %v1097, 2147483648
    %v1106 = vxor.u32 %v1098, 2147483648
    %v1107 = vxor.u32 %v1099, 2147483648
    %v1108 = vxor.u32 %v1100, 2147483648
    %v1109 = vmul.f32 %v1101, 1.442695
    %v1110 = vpow.pop %v1109
    %v1111 = vmul.f32 %v1102, 1.442695
    %v1112 = vpow.pop %v1111
    %v1113 = vmul.f32 %v1103, 1.442695
    %v1114 = vpow.pop %v1113
    %v1115 = vmul.f32 %v1104, 1.442695
    %v1116 = vpow.pop %v1115
    %v1117 = vmul.f32 %v1105, 1.442695
    %v1118 = vpow.pop %v1117
    %v1119 = vmul.f32 %v1106, 1.442695
    %v1120 = vpow.pop %v1119
    %v1121 = vmul.f32 %v1107, 1.442695
    %v1122 = vpow.pop %v1121
    %v1123 = vmul.f32 %v1108, 1.442695
    %v1124 = vpow.pop %v1123
    %v1125 = vadd.f32 %v1110, 1.0
    %v1126 = vadd.f32 %v1112, 1.0
    %v1127 = vadd.f32 %v1114, 1.0
    %v1128 = vadd.f32 %v1116, 1.0
    %v1129 = vadd.f32 %v1118, 1.0
    %v1130 = vadd.f32 %v1120, 1.0
    %v1131 = vadd.f32 %v1122, 1.0
    %v1132 = vadd.f32 %v1124, 1.0
    %v1133 = vrcp.pop %v1125
    %v1134 = vmul.f32 1.0, %v1133
    %v1135 = vrcp.pop %v1126
    %v1136 = vmul.f32 1.0, %v1135
    %v1137 = vrcp.pop %v1127
    %v1138 = vmul.f32 1.0, %v1137
    %v1139 = vrcp.pop %v1128
    %v1140 = vmul.f32 1.0, %v1139
    %v1141 = vrcp.pop %v1129
    %v1142 = vmul.f32 1.0, %v1141
    %v1143 = vrcp.pop %v1130
    %v1144 = vmul.f32 1.0, %v1143
    %v1145 = vrcp.pop %v1131
    %v1146 = vmul.f32 1.0, %v1145
    %v1147 = vrcp.pop %v1132
    %v1148 = vmul.f32 1.0, %v1147
    %s1149 = sld [smem:[#allocation2 + $0x1]]
    %v1150 = vstv %s1149
    %v1151 = vmul.f32 %v1134, %v1150
    %v1152 = vmul.f32 %v1136, %v1150
    %v1153 = vmul.f32 %v1138, %v1150
    %v1154 = vmul.f32 %v1140, %v1150
    %v1155 = vmul.f32 %v1142, %v1150
    %v1156 = vmul.f32 %v1144, %v1150
    %v1157 = vmul.f32 %v1146, %v1150
    %v1158 = vmul.f32 %v1148, %v1150
    %v1159 = vmul.f32 %v33, %v1151
    %v1160 = vmul.f32 %v34, %v1152
    %v1161 = vmul.f32 %v35, %v1153
    %v1162 = vmul.f32 %v36, %v1154
    %v1163 = vmul.f32 %v37, %v1155
    %v1164 = vmul.f32 %v38, %v1156
    %v1165 = vmul.f32 %v39, %v1157
    %v1166 = vmul.f32 %v40, %v1158
    %1167 = vst.msk [vmem:[%s5] sm:$0xff] %vm114, %v1159
    %1168 = vst.msk [vmem:[%s5 + $0x8] sm:$0xff] %vm114, %v1160
    %1169 = vst.msk [vmem:[%s5 + $0x10] sm:$0xff] %vm114, %v1161
    %1170 = vst.msk [vmem:[%s5 + $0x18] sm:$0xff] %vm114, %v1162
    %1171 = vst.msk [vmem:[%s5 + $0x20] sm:$0xff] %vm114, %v1163
    %1172 = vst.msk [vmem:[%s5 + $0x28] sm:$0xff] %vm114, %v1164
    %1173 = vst.msk [vmem:[%s5 + $0x30] sm:$0xff] %vm114, %v1165
    %1174 = vst.msk [vmem:[%s5 + $0x38] sm:$0xff] %vm114, %v1166
    // Predicated region
    $region26: #{tpu_custom_call.1} parent=1 // pred_check
      _
    $region27: #{tpu_custom_call.1} parent=1 // pred_check_branch
      %1176 = sbr.rel (0) target = $region29
    $region28: #{tpu_custom_call.1} parent=1 // pred_region
      _
    $region29: #{tpu_custom_call.1} parent=1 // pred_fallthru
      _
    // Predicated region
    $region30: #{tpu_custom_call.1} parent=1 // pred_check
      _
    $region31: #{tpu_custom_call.1} parent=1 // pred_check_branch
      %1178 = sbr.rel (0) target = $region33
    $region32: #{tpu_custom_call.1} parent=1 // pred_region
      _
    $region33: #{tpu_custom_call.1} parent=1 // pred_fallthru
      _
    %1179 = vsyncpa [#allocation3], 1

</llo_original>
